<compile_context>
chip_gen: v7x
topology: tpu7x:2x2x1
jax: 0.10.0
libtpu: 0.0.40
codegen_flags: <defaults>
</compile_context>

<pallas_src>
import functools

import jax
import jax.numpy as jnp
from jax.experimental import pallas as pl
from jax.experimental.pallas import tpu as pltpu

FP = 128   # padded feature lanes (node_features -> 128)
CP = 128   # padded class lanes (num_classes -> 128)


def _round_up(x, m):
    return ((x + m - 1) // m) * m


def _choose_row_tiling(n):
    """Pick (row_tile, padded_rows): MXU-friendly tiles, grid >= 2 if possible."""
    if n >= 512:
        tile = 256                          # big tiles amortize per-step overhead
    elif n >= 16:
        tile = _round_up((n + 1) // 2, 8)   # ~N/2 -> 2 grid points (v7x megacore)
    else:
        tile = _round_up(max(n, 8), 8)
    return tile, _round_up(n, tile)


def _vmem_limit_bytes():
    """~3/4 of physical VMEM (96 MiB on v5e/v6e, 48 MiB on v7x)."""
    try:
        cap = int(pltpu.get_tpu_info().vmem_capacity_bytes)
    except Exception:
        cap = 64 * 1024 * 1024
    lim = cap * 3 // 4
    return max(32 * 1024 * 1024, min(lim, 96 * 1024 * 1024))


# ---------------------------------------------------------------------------
# Pallas kernels
# ---------------------------------------------------------------------------
def _gru_step_kernel(iw_ref, wcat_ref, bcat_ref, o_ref):
    """One PyTorch-semantics GRU step per layer (gate order r, z, n); x == h == W.

    iw_ref  : [1, Fp, Fp]    f32   carried weight state (bf16 only at the MXU)
    wcat_ref: [1, Fp, 6*Fp]  bf16  [Wih_r|Wih_z|Wih_n|Whh_r|Whh_z|Whh_n], pre-T
    bcat_ref: [1, 1, 6*Fp]   f32   matching concatenated biases
    o_ref   : [1, Fp, Fp]    f32   evolved weight state
    """
    h = iw_ref[0]                                        # f32 [Fp, Fp]
    fp = h.shape[-1]
    # Six gate GEMMs fused into one wide dot (3 full 256-wide MXU passes).
    g = jnp.dot(h.astype(jnp.bfloat16), wcat_ref[0],
                preferred_element_type=jnp.float32) + bcat_ref[0]
    # Static 128-lane slices are free.  r first so it dies before z is live.
    r = jax.nn.sigmoid(g[:, 0 * fp:1 * fp] + g[:, 3 * fp:4 * fp])
    n = jnp.tanh(g[:, 2 * fp:3 * fp] + r * g[:, 5 * fp:6 * fp])
    z = jax.nn.sigmoid(g[:, 1 * fp:2 * fp] + g[:, 4 * fp:5 * fp])
    # h' = (1-z)*n + z*h  rewritten to trim live f32 [128,128] temporaries.
    # NOTE: padded rows (>= feat) of the output pick up bias-only gate values;
    # this is harmless because padded columns of the activations stay zero.
    o_ref[0] = h + (1.0 - z) * (n - h)


def _gcn1_kernel(a_ref, x_ref, w_ref, xw2_ref):
    """Per row tile: h1 = relu((A_tile @ X) @ W1);  output XW2 = h1 @ W2.

    Emitting XW2 here (each tile only its own rows, no redundancy) turns the
    head kernel's GCN propagation into a single A_tile @ XW2 matmul.
    """
    ax = jnp.dot(a_ref[...], x_ref[...], preferred_element_type=jnp.float32)
    h1 = jnp.maximum(
        jnp.dot(ax.astype(jnp.bfloat16), w_ref[0],
                preferred_element_type=jnp.float32), 0.0)
    # TODO(synk): F.dropout(x, training=self.training) — identity (eval mode).
    xw2_ref[...] = jnp.dot(h1.astype(jnp.bfloat16), w_ref[1],
                           preferred_element_type=jnp.float32
                           ).astype(xw2_ref.dtype)


def _gcn_head_kernel(a_ref, xw2_ref, lw_ref, lb_ref, o_ref):
    """Per row tile: relu(A_tile @ XW2) -> Linear -> log_softmax (lane-padded).

    Padded class lanes carry bias -1e30, so they contribute ~0 to the softmax
    denominator and the first num_classes lanes are exact.
    """
    h2 = jnp.maximum(
        jnp.dot(a_ref[...], xw2_ref[...], preferred_element_type=jnp.float32),
        0.0)
    # TODO(synk): F.dropout(x, training=self.training) — identity (eval mode).
    logits = jnp.dot(h2.astype(jnp.bfloat16), lw_ref[...],
                     preferred_element_type=jnp.float32) + lb_ref[...]
    m = jnp.max(logits, axis=-1, keepdims=True)
    s = logits - m
    lse = jnp.log(jnp.sum(jnp.exp(s), axis=-1, keepdims=True))
    o_ref[...] = s - lse


# ---------------------------------------------------------------------------
# pallas_call wrappers
# ---------------------------------------------------------------------------
def evolve_weights(pp):
    """Both EvolveGCNO GRU weight-evolution steps in one call (grid over layers)."""
    n_layers, fp, _ = pp["iw"].shape
    return pl.pallas_call(
        _gru_step_kernel,
        out_shape=jax.ShapeDtypeStruct((n_layers, fp, fp), jnp.float32),
        grid_spec=pltpu.PrefetchScalarGridSpec(
            num_scalar_prefetch=0,
            grid=(n_layers,),
            in_specs=[
                pl.BlockSpec((1, fp, fp), lambda l: (l, 0, 0)),
                pl.BlockSpec((1, fp, 6 * fp), lambda l: (l, 0, 0)),
                pl.BlockSpec((1, 1, 6 * fp), lambda l: (l, 0, 0)),
            ],
            out_specs=pl.BlockSpec((1, fp, fp), lambda l: (l, 0, 0)),
        ),
        compiler_params=pltpu.CompilerParams(
            dimension_semantics=("parallel",)),
    )(pp["iw"], pp["w_cat"], pp["b_cat"])


def gcn_layer1(a_norm, x, w_stack, *, tile_n):
    """Layer-1 GCN + ReLU fused with the layer-2 feature transform (XW2)."""
    n_pad, fp = x.shape
    return pl.pallas_call(
        _gcn1_kernel,
        out_shape=jax.ShapeDtypeStruct((n_pad, fp), jnp.bfloat16),
        grid_spec=pltpu.PrefetchScalarGridSpec(
            num_scalar_prefetch=0,
            grid=(n_pad // tile_n,),
            in_specs=[
                pl.BlockSpec((tile_n, n_pad), lambda i: (i, 0)),   # A row tile
                pl.BlockSpec((n_pad, fp), lambda i: (0, 0)),       # X (resident)
                pl.BlockSpec((2, fp, fp), lambda i: (0, 0, 0)),    # [W1, W2]
            ],
            out_specs=pl.BlockSpec((tile_n, fp), lambda i: (i, 0)),
        ),
        compiler_params=pltpu.CompilerParams(
            dimension_semantics=("parallel",),
            vmem_limit_bytes=_vmem_limit_bytes()),
    )(a_norm, x, w_stack)


def gcn_head(a_norm, xw2, lin_w, lin_b, *, tile_n):
    """Layer-2 propagation + ReLU + Linear + log_softmax fused per row tile."""
    n_pad, fp = xw2.shape
    cp = lin_w.shape[1]
    return pl.pallas_call(
        _gcn_head_kernel,
        out_shape=jax.ShapeDtypeStruct((n_pad, cp), jnp.float32),
        grid_spec=pltpu.PrefetchScalarGridSpec(
            num_scalar_prefetch=0,
            grid=(n_pad // tile_n,),
            in_specs=[
                pl.BlockSpec((tile_n, n_pad), lambda i: (i, 0)),   # A row tile
                pl.BlockSpec((n_pad, fp), lambda i: (0, 0)),       # XW2 (resident)
                pl.BlockSpec((fp, cp), lambda i: (0, 0)),          # lin_w (bf16)
                pl.BlockSpec((1, cp), lambda i: (0, 0)),           # lin_b (f32)
            ],
            out_specs=pl.BlockSpec((tile_n, cp), lambda i: (i, 0)),
        ),
        compiler_params=pltpu.CompilerParams(
            dimension_semantics=("parallel",),
            vmem_limit_bytes=_vmem_limit_bytes()),
    )(a_norm, xw2, lin_w, lin_b)


# ---------------------------------------------------------------------------
# Plain-JAX glue: gcn_norm (add_remaining_self_loops + sym normalization), dense
# ---------------------------------------------------------------------------
def build_norm_adj(edge_index, edge_weight, num_nodes, num_nodes_pad):
    src, dst = edge_index[0], edge_index[1]
    # add_remaining_self_loops: nodes that already have a self-loop keep their
    # weight (no double counting); others get a fill_value=1.0 loop.
    has_loop = jnp.zeros((num_nodes,), jnp.int32).at[src].max(
        (src == dst).astype(jnp.int32))
    loop_w = jnp.where(has_loop > 0, 0.0, 1.0).astype(edge_weight.dtype)
    loop = jnp.arange(num_nodes, dtype=src.dtype)
    src = jnp.concatenate([src, loop])
    dst = jnp.concatenate([dst, loop])
    w = jnp.concatenate([edge_weight, loop_w])
    deg = jnp.zeros((num_nodes,), edge_weight.dtype).at[dst].add(w)
    dinv = jnp.where(deg > 0, jax.lax.rsqrt(deg), 0.0)
    norm = dinv[src] * w * dinv[dst]
    # A_norm[i, j] = sum of norm over edges j -> i (message x_j aggregated at i)
    # Padded rows/cols stay exactly zero.
    a = jnp.zeros((num_nodes_pad, num_nodes_pad),
                  edge_weight.dtype).at[dst, src].add(norm)
    return a


# ---------------------------------------------------------------------------
# RecurrentGCN forward
# ---------------------------------------------------------------------------
def recurrent_gcn_forward(pp, x, edge_index, edge_weight, *, num_classes):
    n = x.shape[0]
    fp = pp["iw"].shape[-1]
    tile_n, n_pad = _choose_row_tiling(n)

    # A_norm as bf16 MXU operand (dominant HBM stream); ~1e-2 level deviation
    # vs an f32 PyTorch reference is expected from this cast.
    a_norm = build_norm_adj(edge_index, edge_weight, n, n_pad).astype(jnp.bfloat16)
    # Zero-pad features to 128 lanes and rows to the tile multiple; padding
    # stays exactly zero through both GCN layers, so results are unchanged.
    xp = jnp.zeros((n_pad, fp), jnp.float32).at[:n, :x.shape[1]].set(x)
    xp = xp.astype(jnp.bfloat16)

    # GRU weight evolution; carried state is f32, cast to bf16 at the MXU only.
    w_state = evolve_weights(pp)                        # [2, Fp, Fp] f32
    w_bf16 = w_state.astype(jnp.bfloat16)

    xw2 = gcn_layer1(a_norm, xp, w_bf16, tile_n=tile_n)     # relu(A X W1) @ W2
    out_padded = gcn_head(a_norm, xw2, pp["lin_w"], pp["lin_b"], tile_n=tile_n)
    return out_padded[:n, :num_classes]


# ---------------------------------------------------------------------------
# Parameter construction (torch layout) + one-time prep (pad/concat/stack)
# ---------------------------------------------------------------------------
def make_params(key, feat, num_classes):
    keys = jax.random.split(key, 16)
    ki = iter(range(16))

    def glorot(k, shape):
        lim = (6.0 / (shape[-1] + shape[-2])) ** 0.5
        return jax.random.uniform(k, shape, jnp.float32, -lim, lim)

    def gru_uniform(k, shape):
        lim = 1.0 / (feat ** 0.5)
        return jax.random.uniform(k, shape, jnp.float32, -lim, lim)

    def evolve_layer():
        return {
            "initial_weight": glorot(keys[next(ki)], (feat, feat)),   # torch (1,F,F)
            "w_ih": gru_uniform(keys[next(ki)], (3 * feat, feat)),    # weight_ih_l0
            "w_hh": gru_uniform(keys[next(ki)], (3 * feat, feat)),    # weight_hh_l0
            "b_ih": gru_uniform(keys[next(ki)], (3 * feat,)),         # bias_ih_l0
            "b_hh": gru_uniform(keys[next(ki)], (3 * feat,)),         # bias_hh_l0
        }

    lin_lim = 1.0 / (feat ** 0.5)
    return {
        "recurrent_1": evolve_layer(),
        "recurrent_2": evolve_layer(),
        # torch.nn.Linear(F, C): weight [C, F]; stored transposed [F, C].
        "lin_w": jax.random.uniform(keys[next(ki)], (feat, num_classes),
                                    jnp.float32, -lin_lim, lin_lim),
        "lin_b": jax.random.uniform(keys[next(ki)], (num_classes,),
                                    jnp.float32, -lin_lim, lin_lim),
    }


def prepare_params(params, feat, num_classes, fp=FP, cp=CP):
    """Pad to lane-dense shapes, fuse GRU gate weights into one wide matrix."""

    def pad2(a, rows, cols):
        return jnp.zeros((rows, cols), a.dtype).at[:a.shape[0], :a.shape[1]].set(a)

    def prep_layer(p):
        f = feat
        iw = pad2(p["initial_weight"], fp, fp)
        # Torch GRU: g = x @ W.T + b, gate order (r, z, n).  Concatenate the six
        # transposed, lane-padded gate matrices along the output dim so the
        # kernel does a single [Fp, 6*Fp] dot.
        gih = [pad2(p["w_ih"][g * f:(g + 1) * f, :].T, fp, fp) for g in range(3)]
        ghh = [pad2(p["w_hh"][g * f:(g + 1) * f, :].T, fp, fp) for g in range(3)]
        w_cat = jnp.concatenate(gih + ghh, axis=1)                     # [Fp, 6Fp]
        bih = [pad2(p["b_ih"][g * f:(g + 1) * f][None, :], 1, fp) for g in range(3)]
        bhh = [pad2(p["b_hh"][g * f:(g + 1) * f][None, :], 1, fp) for g in range(3)]
        b_cat = jnp.concatenate(bih + bhh, axis=1)                     # [1, 6Fp]
        return iw, w_cat, b_cat

    l1 = prep_layer(params["recurrent_1"])
    l2 = prep_layer(params["recurrent_2"])
    lin_w = pad2(params["lin_w"], fp, cp)
    # Padded class lanes get a -1e30 bias so log_softmax ignores them exactly.
    lin_b = jnp.full((1, cp), -1e30, jnp.float32).at[0, :num_classes].set(
        params["lin_b"])
    return {
        # Carried GRU weight state stays f32 (bf16 only at the MXU operand).
        "iw": jnp.stack([l1[0], l2[0]]),                              # [2,Fp,Fp]
        "w_cat": jnp.stack([l1[1], l2[1]]).astype(jnp.bfloat16),      # [2,Fp,6Fp]
        "b_cat": jnp.stack([l1[2], l2[2]]),                           # [2,1,6Fp]
        "lin_w": lin_w.astype(jnp.bfloat16),                          # [Fp,Cp]
        "lin_b": lin_b,                                               # [1,Cp]
    }


if __name__ == "__main__":
    NODE_FEATURES = 32   # small stand-in for node_features = 100
    NUM_CLASSES = 10
    N_NODES = 64
    N_EDGES = 200

    root = jax.random.PRNGKey(0)
    k_par, k_x, k_ei, k_ew = jax.random.split(root, 4)

    params = make_params(k_par, NODE_FEATURES, NUM_CLASSES)
    prepped = prepare_params(params, NODE_FEATURES, NUM_CLASSES)

    x = jax.random.normal(k_x, (N_NODES, NODE_FEATURES), jnp.float32)
    edge_index = jax.random.randint(k_ei, (2, N_EDGES), 0, N_NODES, jnp.int32)
    edge_weight = jax.random.uniform(k_ew, (N_EDGES,), jnp.float32, 0.1, 1.0)

    fwd = jax.jit(functools.partial(recurrent_gcn_forward,
                                    num_classes=NUM_CLASSES))
    out = fwd(prepped, x, edge_index, edge_weight)
    out = jax.block_until_ready(out)

    assert out.shape == (N_NODES, NUM_CLASSES)
    assert out.dtype == jnp.float32
    # log_softmax rows must sum to 1 in prob space
    assert jnp.allclose(jnp.sum(jnp.exp(out), axis=1), 1.0, atol=1e-4)
    print("KERNEL_OK")
</pallas_src>

<mosaic_0001>
module attributes {stable_mosaic.version = 11 : i64} {
  func.func @_gru_step_kernel(%arg0: i32, %arg1: memref<1x128x128xf32, #tpu.memory_space<vmem>>, %arg2: memref<1x128x768xbf16, #tpu.memory_space<vmem>>, %arg3: memref<1x1x768xf32, #tpu.memory_space<vmem>>, %arg4: memref<1x128x128xf32, #tpu.memory_space<vmem>>) attributes {dimension_semantics = [#tpu.dimension_semantics<parallel>], iteration_bounds = array<i64: 2>, scalar_prefetch = 0 : i64, scratch_operands = 0 : i64, tpu.core_type = #tpu.core_type<tc>, window_params = [{transform_indices = @transform_0, window_bounds = array<i64: 1, 128, 128>}, {transform_indices = @transform_1, window_bounds = array<i64: 1, 128, 768>}, {transform_indices = @transform_2, window_bounds = array<i64: 1, 1, 768>}, {transform_indices = @transform_3, window_bounds = array<i64: 1, 128, 128>}]} {
    %c0 = arith.constant 0 : index
    %c0_0 = arith.constant 0 : index
    %c0_1 = arith.constant 0 : index
    %0 = vector.load %arg1[%c0, %c0_0, %c0_1] : memref<1x128x128xf32, #tpu.memory_space<vmem>>, vector<1x128x128xf32>
    %1 = vector.shape_cast %0 : vector<1x128x128xf32> to vector<128x128xf32>
    %2 = arith.truncf %1 : vector<128x128xf32> to vector<128x128xbf16>
    %c0_2 = arith.constant 0 : index
    %c0_3 = arith.constant 0 : index
    %c0_4 = arith.constant 0 : index
    %3 = vector.load %arg2[%c0_2, %c0_3, %c0_4] : memref<1x128x768xbf16, #tpu.memory_space<vmem>>, vector<1x128x768xbf16>
    %4 = vector.shape_cast %3 : vector<1x128x768xbf16> to vector<128x768xbf16>
    %cst = arith.constant dense<0.000000e+00> : vector<128x768xf32>
    %5 = tpu.matmul %2, %4, %cst {dimension_numbers = #tpu.dot_dimension_numbers<[1], [0], [0], [1], [0, 0, 1, 1], [], []>} : vector<128x128xbf16>, vector<128x768xbf16>, vector<128x768xf32> -> vector<128x768xf32>
    %c0_5 = arith.constant 0 : index
    %c0_6 = arith.constant 0 : index
    %c0_7 = arith.constant 0 : index
    %6 = vector.load %arg3[%c0_5, %c0_6, %c0_7] : memref<1x1x768xf32, #tpu.memory_space<vmem>>, vector<1x1x768xf32>
    %7 = vector.shape_cast %6 : vector<1x1x768xf32> to vector<1x768xf32>
    %8 = vector.broadcast %7 : vector<1x768xf32> to vector<128x768xf32>
    %9 = arith.addf %5, %8 : vector<128x768xf32>
    %10 = vector.extract_strided_slice %9 {offsets = [0, 0], sizes = [128, 128], strides = [1, 1]} : vector<128x768xf32> to vector<128x128xf32>
    %11 = vector.extract_strided_slice %9 {offsets = [0, 384], sizes = [128, 128], strides = [1, 1]} : vector<128x768xf32> to vector<128x128xf32>
    %12 = arith.addf %10, %11 : vector<128x128xf32>
    %13 = arith.negf %12 : vector<128x128xf32>
    %14 = math.exp %13 : vector<128x128xf32>
    %cst_8 = arith.constant 1.000000e+00 : f32
    %15 = vector.broadcast %cst_8 : f32 to vector<128x128xf32>
    %16 = arith.addf %15, %14 : vector<128x128xf32>
    %17 = arith.divf %15, %16 : vector<128x128xf32>
    %18 = vector.extract_strided_slice %9 {offsets = [0, 256], sizes = [128, 128], strides = [1, 1]} : vector<128x768xf32> to vector<128x128xf32>
    %19 = vector.extract_strided_slice %9 {offsets = [0, 640], sizes = [128, 128], strides = [1, 1]} : vector<128x768xf32> to vector<128x128xf32>
    %20 = arith.mulf %17, %19 : vector<128x128xf32>
    %21 = arith.addf %18, %20 : vector<128x128xf32>
    %22 = math.tanh %21 : vector<128x128xf32>
    %23 = vector.extract_strided_slice %9 {offsets = [0, 128], sizes = [128, 128], strides = [1, 1]} : vector<128x768xf32> to vector<128x128xf32>
    %24 = vector.extract_strided_slice %9 {offsets = [0, 512], sizes = [128, 128], strides = [1, 1]} : vector<128x768xf32> to vector<128x128xf32>
    %25 = arith.addf %23, %24 : vector<128x128xf32>
    %26 = arith.negf %25 : vector<128x128xf32>
    %27 = math.exp %26 : vector<128x128xf32>
    %cst_9 = arith.constant 1.000000e+00 : f32
    %28 = vector.broadcast %cst_9 : f32 to vector<128x128xf32>
    %29 = arith.addf %28, %27 : vector<128x128xf32>
    %30 = arith.divf %28, %29 : vector<128x128xf32>
    %cst_10 = arith.constant 1.000000e+00 : f32
    %31 = vector.broadcast %cst_10 : f32 to vector<128x128xf32>
    %32 = arith.subf %31, %30 : vector<128x128xf32>
    %33 = arith.subf %22, %1 : vector<128x128xf32>
    %34 = arith.mulf %32, %33 : vector<128x128xf32>
    %35 = arith.addf %1, %34 : vector<128x128xf32>
    %c0_11 = arith.constant 0 : index
    %c0_12 = arith.constant 0 : index
    %c0_13 = arith.constant 0 : index
    %36 = vector.load %arg4[%c0_11, %c0_12, %c0_13] : memref<1x128x128xf32, #tpu.memory_space<vmem>>, vector<1x128x128xf32>
    %37 = vector.shape_cast %36 : vector<1x128x128xf32> to vector<128x128xf32>
    %38 = vector.shape_cast %35 : vector<128x128xf32> to vector<1x128x128xf32>
    tpu.vector_store %arg4[%c0_11, %c0_12, %c0_13], %38 {strides = array<i32>} : memref<1x128x128xf32, #tpu.memory_space<vmem>>, vector<1x128x128xf32>,
    return
  }
  func.func @transform_0(%arg0: i32) -> (i32, i32, i32) {
    %c0_i32 = arith.constant 0 : i32
    %c0_i32_0 = arith.constant 0 : i32
    %c0_i32_1 = arith.constant 0 : i32
    return %arg0, %c0_i32, %c0_i32_0 : i32, i32, i32
  }
  func.func @transform_1(%arg0: i32) -> (i32, i32, i32) {
    %c0_i32 = arith.constant 0 : i32
    %c0_i32_0 = arith.constant 0 : i32
    %c0_i32_1 = arith.constant 0 : i32
    return %arg0, %c0_i32, %c0_i32_0 : i32, i32, i32
  }
  func.func @transform_2(%arg0: i32) -> (i32, i32, i32) {
    %c0_i32 = arith.constant 0 : i32
    %c0_i32_0 = arith.constant 0 : i32
    %c0_i32_1 = arith.constant 0 : i32
    return %arg0, %c0_i32, %c0_i32_0 : i32, i32, i32
  }
  func.func @transform_3(%arg0: i32) -> (i32, i32, i32) {
    %c0_i32 = arith.constant 0 : i32
    %c0_i32_0 = arith.constant 0 : i32
    %c0_i32_1 = arith.constant 0 : i32
    return %arg0, %c0_i32, %c0_i32_0 : i32, i32, i32
  }
}

module attributes {stable_mosaic.version = 11 : i64} {
  func.func @_gcn_head_kernel(%arg0: i32, %arg1: memref<32x64xbf16, #tpu.memory_space<vmem>>, %arg2: memref<64x128xbf16, #tpu.memory_space<vmem>>, %arg3: memref<128x128xbf16, #tpu.memory_space<vmem>>, %arg4: memref<1x128xf32, #tpu.memory_space<vmem>>, %arg5: memref<32x128xf32, #tpu.memory_space<vmem>>) attributes {dimension_semantics = [#tpu.dimension_semantics<parallel>], iteration_bounds = array<i64: 2>, scalar_prefetch = 0 : i64, scratch_operands = 0 : i64, tpu.core_type = #tpu.core_type<tc>, window_params = [{transform_indices = @transform_0, window_bounds = array<i64: 32, 64>}, {pipeline_mode = #tpu.pipeline_mode<synchronous>, transform_indices = @transform_1, window_bounds = array<i64: 64, 128>}, {pipeline_mode = #tpu.pipeline_mode<synchronous>, transform_indices = @transform_2, window_bounds = array<i64: 128, 128>}, {pipeline_mode = #tpu.pipeline_mode<synchronous>, transform_indices = @transform_3, window_bounds = array<i64: 1, 128>}, {transform_indices = @transform_4, window_bounds = array<i64: 32, 128>}]} {
    %c0 = arith.constant 0 : index
    %c0_0 = arith.constant 0 : index
    %0 = vector.load %arg1[%c0, %c0_0] : memref<32x64xbf16, #tpu.memory_space<vmem>>, vector<32x64xbf16>
    %c0_1 = arith.constant 0 : index
    %c0_2 = arith.constant 0 : index
    %1 = vector.load %arg2[%c0_1, %c0_2] : memref<64x128xbf16, #tpu.memory_space<vmem>>, vector<64x128xbf16>
    %cst = arith.constant dense<0.000000e+00> : vector<32x128xf32>
    %2 = tpu.matmul %0, %1, %cst {dimension_numbers = #tpu.dot_dimension_numbers<[1], [0], [0], [1], [0, 0, 1, 1], [], []>} : vector<32x64xbf16>, vector<64x128xbf16>, vector<32x128xf32> -> vector<32x128xf32>
    %cst_3 = arith.constant 0.000000e+00 : f32
    %3 = vector.broadcast %cst_3 : f32 to vector<32x128xf32>
    %4 = arith.maximumf %2, %3 : vector<32x128xf32>
    %5 = arith.truncf %4 : vector<32x128xf32> to vector<32x128xbf16>
    %c0_4 = arith.constant 0 : index
    %c0_5 = arith.constant 0 : index
    %6 = vector.load %arg3[%c0_4, %c0_5] : memref<128x128xbf16, #tpu.memory_space<vmem>>, vector<128x128xbf16>
    %cst_6 = arith.constant dense<0.000000e+00> : vector<32x128xf32>
    %7 = tpu.matmul %5, %6, %cst_6 {dimension_numbers = #tpu.dot_dimension_numbers<[1], [0], [0], [1], [0, 0, 1, 1], [], []>} : vector<32x128xbf16>, vector<128x128xbf16>, vector<32x128xf32> -> vector<32x128xf32>
    %c0_7 = arith.constant 0 : index
    %c0_8 = arith.constant 0 : index
    %8 = vector.load %arg4[%c0_7, %c0_8] : memref<1x128xf32, #tpu.memory_space<vmem>>, vector<1x128xf32>
    %9 = vector.broadcast %8 : vector<1x128xf32> to vector<32x128xf32>
    %10 = arith.addf %7, %9 : vector<32x128xf32>
    %cst_9 = arith.constant dense<0xFF800000> : vector<32xf32>
    %11 = vector.multi_reduction <maximumf>, %10, %cst_9 [1] : vector<32x128xf32> to vector<32xf32>
    %12 = vector.shape_cast %11 : vector<32xf32> to vector<32x1xf32>
    %13 = vector.broadcast %12 : vector<32x1xf32> to vector<32x128xf32>
    %14 = arith.subf %10, %13 : vector<32x128xf32>
    %15 = math.exp %14 : vector<32x128xf32>
    %cst_10 = arith.constant dense<0.000000e+00> : vector<32xf32>
    %16 = vector.multi_reduction <add>, %15, %cst_10 [1] : vector<32x128xf32> to vector<32xf32>
    %17 = vector.shape_cast %16 : vector<32xf32> to vector<32x1xf32>
    %18 = math.log %17 : vector<32x1xf32>
    %19 = vector.broadcast %18 : vector<32x1xf32> to vector<32x128xf32>
    %20 = arith.subf %14, %19 : vector<32x128xf32>
    %c0_11 = arith.constant 0 : index
    %c0_12 = arith.constant 0 : index
    %21 = vector.load %arg5[%c0_11, %c0_12] : memref<32x128xf32, #tpu.memory_space<vmem>>, vector<32x128xf32>
    tpu.vector_store %arg5[%c0_11, %c0_12], %20 {strides = array<i32>} : memref<32x128xf32, #tpu.memory_space<vmem>>, vector<32x128xf32>,
    return
  }
  func.func @transform_0(%arg0: i32) -> (i32, i32) {
    %c0_i32 = arith.constant 0 : i32
    %c0_i32_0 = arith.constant 0 : i32
    return %arg0, %c0_i32 : i32, i32
  }
  func.func @transform_1(%arg0: i32) -> (i32, i32) {
    %c0_i32 = arith.constant 0 : i32
    %c0_i32_0 = arith.constant 0 : i32
    %c0_i32_1 = arith.constant 0 : i32
    return %c0_i32, %c0_i32_0 : i32, i32
  }
  func.func @transform_2(%arg0: i32) -> (i32, i32) {
    %c0_i32 = arith.constant 0 : i32
    %c0_i32_0 = arith.constant 0 : i32
    %c0_i32_1 = arith.constant 0 : i32
    return %c0_i32, %c0_i32_0 : i32, i32
  }
  func.func @transform_3(%arg0: i32) -> (i32, i32) {
    %c0_i32 = arith.constant 0 : i32
    %c0_i32_0 = arith.constant 0 : i32
    %c0_i32_1 = arith.constant 0 : i32
    return %c0_i32, %c0_i32_0 : i32, i32
  }
  func.func @transform_4(%arg0: i32) -> (i32, i32) {
    %c0_i32 = arith.constant 0 : i32
    %c0_i32_0 = arith.constant 0 : i32
    return %arg0, %c0_i32 : i32, i32
  }
}

module attributes {stable_mosaic.version = 11 : i64} {
  func.func @_gcn1_kernel(%arg0: i32, %arg1: memref<32x64xbf16, #tpu.memory_space<vmem>>, %arg2: memref<64x128xbf16, #tpu.memory_space<vmem>>, %arg3: memref<2x128x128xbf16, #tpu.memory_space<vmem>>, %arg4: memref<32x128xbf16, #tpu.memory_space<vmem>>) attributes {dimension_semantics = [#tpu.dimension_semantics<parallel>], iteration_bounds = array<i64: 2>, scalar_prefetch = 0 : i64, scratch_operands = 0 : i64, tpu.core_type = #tpu.core_type<tc>, window_params = [{transform_indices = @transform_0, window_bounds = array<i64: 32, 64>}, {pipeline_mode = #tpu.pipeline_mode<synchronous>, transform_indices = @transform_1, window_bounds = array<i64: 64, 128>}, {pipeline_mode = #tpu.pipeline_mode<synchronous>, transform_indices = @transform_2, window_bounds = array<i64: 2, 128, 128>}, {transform_indices = @transform_3, window_bounds = array<i64: 32, 128>}]} {
    %c0 = arith.constant 0 : index
    %c0_0 = arith.constant 0 : index
    %0 = vector.load %arg1[%c0, %c0_0] : memref<32x64xbf16, #tpu.memory_space<vmem>>, vector<32x64xbf16>
    %c0_1 = arith.constant 0 : index
    %c0_2 = arith.constant 0 : index
    %1 = vector.load %arg2[%c0_1, %c0_2] : memref<64x128xbf16, #tpu.memory_space<vmem>>, vector<64x128xbf16>
    %cst = arith.constant dense<0.000000e+00> : vector<32x128xf32>
    %2 = tpu.matmul %0, %1, %cst {dimension_numbers = #tpu.dot_dimension_numbers<[1], [0], [0], [1], [0, 0, 1, 1], [], []>} : vector<32x64xbf16>, vector<64x128xbf16>, vector<32x128xf32> -> vector<32x128xf32>
    %3 = arith.truncf %2 : vector<32x128xf32> to vector<32x128xbf16>
    %c0_3 = arith.constant 0 : index
    %c0_4 = arith.constant 0 : index
    %c0_5 = arith.constant 0 : index
    %4 = vector.load %arg3[%c0_3, %c0_4, %c0_5] : memref<2x128x128xbf16, #tpu.memory_space<vmem>>, vector<1x128x128xbf16>
    %5 = vector.shape_cast %4 : vector<1x128x128xbf16> to vector<128x128xbf16>
    %cst_6 = arith.constant dense<0.000000e+00> : vector<32x128xf32>
    %6 = tpu.matmul %3, %5, %cst_6 {dimension_numbers = #tpu.dot_dimension_numbers<[1], [0], [0], [1], [0, 0, 1, 1], [], []>} : vector<32x128xbf16>, vector<128x128xbf16>, vector<32x128xf32> -> vector<32x128xf32>
    %cst_7 = arith.constant 0.000000e+00 : f32
    %7 = vector.broadcast %cst_7 : f32 to vector<32x128xf32>
    %8 = arith.maximumf %6, %7 : vector<32x128xf32>
    %9 = arith.truncf %8 : vector<32x128xf32> to vector<32x128xbf16>
    %c1 = arith.constant 1 : index
    %c0_8 = arith.constant 0 : index
    %c0_9 = arith.constant 0 : index
    %10 = vector.load %arg3[%c1, %c0_8, %c0_9] : memref<2x128x128xbf16, #tpu.memory_space<vmem>>, vector<1x128x128xbf16>
    %11 = vector.shape_cast %10 : vector<1x128x128xbf16> to vector<128x128xbf16>
    %cst_10 = arith.constant dense<0.000000e+00> : vector<32x128xf32>
    %12 = tpu.matmul %9, %11, %cst_10 {dimension_numbers = #tpu.dot_dimension_numbers<[1], [0], [0], [1], [0, 0, 1, 1], [], []>} : vector<32x128xbf16>, vector<128x128xbf16>, vector<32x128xf32> -> vector<32x128xf32>
    %13 = arith.truncf %12 : vector<32x128xf32> to vector<32x128xbf16>
    %c0_11 = arith.constant 0 : index
    %c0_12 = arith.constant 0 : index
    %14 = vector.load %arg4[%c0_11, %c0_12] : memref<32x128xbf16, #tpu.memory_space<vmem>>, vector<32x128xbf16>
    tpu.vector_store %arg4[%c0_11, %c0_12], %13 {strides = array<i32>} : memref<32x128xbf16, #tpu.memory_space<vmem>>, vector<32x128xbf16>,
    return
  }
  func.func @transform_0(%arg0: i32) -> (i32, i32) {
    %c0_i32 = arith.constant 0 : i32
    %c0_i32_0 = arith.constant 0 : i32
    return %arg0, %c0_i32 : i32, i32
  }
  func.func @transform_1(%arg0: i32) -> (i32, i32) {
    %c0_i32 = arith.constant 0 : i32
    %c0_i32_0 = arith.constant 0 : i32
    %c0_i32_1 = arith.constant 0 : i32
    return %c0_i32, %c0_i32_0 : i32, i32
  }
  func.func @transform_2(%arg0: i32) -> (i32, i32, i32) {
    %c0_i32 = arith.constant 0 : i32
    %c0_i32_0 = arith.constant 0 : i32
    %c0_i32_1 = arith.constant 0 : i32
    %c0_i32_2 = arith.constant 0 : i32
    return %c0_i32, %c0_i32_0, %c0_i32_1 : i32, i32, i32
  }
  func.func @transform_3(%arg0: i32) -> (i32, i32) {
    %c0_i32 = arith.constant 0 : i32
    %c0_i32_0 = arith.constant 0 : i32
    return %arg0, %c0_i32 : i32, i32
  }
}

</mosaic_0001>

<llo_original>
// kernel: recurrent_gcn_forward.5
$region0: #{recurrent_gcn_forward.5}
  #allocation0 [shape = 'u32[]', space=smem, size = 0x4, offset = 0x4, fixed_abs, tag = 'smem constant byte address 0x4 - core index']
  #allocation1 [shape = 'u32[144,128]{1,0:T(1,128)}', space=vmem, size = 0x12000, scoped, tag = 'internal scratch']
  %s0 = inlined_call_operand.vmem [shape: bf16[64,64], index: 0, kind: input, shape index: {}]
  %s1 = inlined_call_operand.vmem [shape: bf16[64,128], index: 1, kind: input, shape index: {}]
  %s2 = inlined_call_operand.vmem [shape: bf16[128,128], index: 2, kind: input, shape index: {}]
  %s3 = inlined_call_operand.vmem [shape: f32[1,128], index: 3, kind: input, shape index: {}]
  %s4 = inlined_call_operand.vmem [shape: f32[64,128], index: 4, kind: output, shape index: {}]
  %s5 = sld [smem:[#allocation0]]
  $region49: #{recurrent_gcn_forward.5} parent=0
    _
  %s7 = ssub.s32 1, %s5
  %s8 = scalar_select 0, %s7, %s5
  loop: start=0, step=1, limit=4
  $region2: #{recurrent_gcn_forward.5} parent=0 // loop_pre_header
    _
  $region3: #{recurrent_gcn_forward.5} parent=0 // loop_header
    %s10 = sphi 0, %s14
    %p11 = scmp.ge.s32.totalorder %s10, 4
    %s20 = sphi 0, %s22
    %s23 = sphi 0, %s20
    %s24 = sphi 0, %s23
    %s40 = sphi 0, %s24
    %s44 = sphi 0, %s44
    %s46 = sphi 0, %s44
    %s47 = sphi 0, %s46
    %s61 = sphi 0, %s47
    %s65 = sphi 0, %s65
    %s67 = sphi 0, %s65
    %s68 = sphi 0, %s67
    %s82 = sphi 0, %s68
    %s86 = sphi 0, %s86
    %s88 = sphi 0, %s86
    %s89 = sphi 0, %s88
    %s103 = sphi 0, %s89
    %s109 = sphi 0, %s111
    %s112 = sphi 0, %s109
    %s113 = sphi 0, %s112
    %s129 = sphi 0, %s113
  $region4: #{recurrent_gcn_forward.5} parent=0 // loop_header_branch
    %13 = sbr.rel (%p11) target = $region8
  $region5: #{recurrent_gcn_forward.5} parent=0 // loop_body
    %s15 = ssub.s32 %s10, 1
    %s16 = ssub.s32 %s10, 2
    %s17 = sadd.s32 %s10, 1
    %s18 = ssub.s32 %s10, %s17
    %p19 = scmp.eq.s32.totalorder %s18, 0
    %s21 = sadd.s32 %s20, 1
    %s22 = scalar_select %p19, %s20, %s21
    %p25 = pneg %p19
    %p26 = scmp.eq.s32.totalorder %s10, 1
    %p27 = por %p25, %p26
    %p28 = scmp.ne.s32.totalorder %s20, %s23
    %p29 = scmp.eq.s32.totalorder %s10, 0
    %p30 = por %p28, %p29
    %p31 = scmp.ne.s32.totalorder %s20, %s23
    %p32 = scmp.eq.s32.totalorder %s15, 1
    %p33 = por %p31, %p32
    %p34 = scmp.ne.s32.totalorder %s23, %s24
    %p35 = scmp.eq.s32.totalorder %s15, 0
    %p36 = por %p34, %p35
    %p37 = scmp.ne.s32.totalorder %s23, %s24
    %p38 = scmp.eq.s32.totalorder %s16, 1
    %p39 = por %p37, %p38
    %p41 = scmp.ne.s32.totalorder %s24, %s40
    %p42 = scmp.eq.s32.totalorder %s16, 0
    %p43 = por %p41, %p42
    %s45 = sadd.s32 %s44, 1
    %p48 = scmp.eq.s32.totalorder %s10, 1
    %p49 = scmp.ne.s32.totalorder %s44, %s46
    %p50 = scmp.eq.s32.totalorder %s10, 0
    %p51 = por %p49, %p50
    %p52 = scmp.ne.s32.totalorder %s44, %s46
    %p53 = scmp.eq.s32.totalorder %s15, 1
    %p54 = por %p52, %p53
    %p55 = scmp.ne.s32.totalorder %s46, %s47
    %p56 = scmp.eq.s32.totalorder %s15, 0
    %p57 = por %p55, %p56
    %p58 = scmp.ne.s32.totalorder %s46, %s47
    %p59 = scmp.eq.s32.totalorder %s16, 1
    %p60 = por %p58, %p59
    %p62 = scmp.ne.s32.totalorder %s47, %s61
    %p63 = scmp.eq.s32.totalorder %s16, 0
    %p64 = por %p62, %p63
    %s66 = sadd.s32 %s65, 1
    %p69 = scmp.eq.s32.totalorder %s10, 1
    %p70 = scmp.ne.s32.totalorder %s65, %s67
    %p71 = scmp.eq.s32.totalorder %s10, 0
    %p72 = por %p70, %p71
    %p73 = scmp.ne.s32.totalorder %s65, %s67
    %p74 = scmp.eq.s32.totalorder %s15, 1
    %p75 = por %p73, %p74
    %p76 = scmp.ne.s32.totalorder %s67, %s68
    %p77 = scmp.eq.s32.totalorder %s15, 0
    %p78 = por %p76, %p77
    %p79 = scmp.ne.s32.totalorder %s67, %s68
    %p80 = scmp.eq.s32.totalorder %s16, 1
    %p81 = por %p79, %p80
    %p83 = scmp.ne.s32.totalorder %s68, %s82
    %p84 = scmp.eq.s32.totalorder %s16, 0
    %p85 = por %p83, %p84
    %s87 = sadd.s32 %s86, 1
    %p90 = scmp.eq.s32.totalorder %s10, 1
    %p91 = scmp.ne.s32.totalorder %s86, %s88
    %p92 = scmp.eq.s32.totalorder %s10, 0
    %p93 = por %p91, %p92
    %p94 = scmp.ne.s32.totalorder %s86, %s88
    %p95 = scmp.eq.s32.totalorder %s15, 1
    %p96 = por %p94, %p95
    %p97 = scmp.ne.s32.totalorder %s88, %s89
    %p98 = scmp.eq.s32.totalorder %s15, 0
    %p99 = por %p97, %p98
    %p100 = scmp.ne.s32.totalorder %s88, %s89
    %p101 = scmp.eq.s32.totalorder %s16, 1
    %p102 = por %p100, %p101
    %p104 = scmp.ne.s32.totalorder %s89, %s103
    %p105 = scmp.eq.s32.totalorder %s16, 0
    %p106 = por %p104, %p105
    %s107 = ssub.s32 %s10, %s17
    %p108 = scmp.eq.s32.totalorder %s107, 0
    %s110 = sadd.s32 %s109, 1
    %s111 = scalar_select %p108, %s109, %s110
    %p114 = pneg %p108
    %p115 = scmp.eq.s32.totalorder %s10, 1
    %p116 = por %p114, %p115
    %p117 = scmp.ne.s32.totalorder %s109, %s112
    %p118 = scmp.eq.s32.totalorder %s10, 0
    %p119 = por %p117, %p118
    %p120 = scmp.ne.s32.totalorder %s109, %s112
    %p121 = scmp.eq.s32.totalorder %s15, 1
    %p122 = por %p120, %p121
    %p123 = scmp.ne.s32.totalorder %s112, %s113
    %p124 = scmp.eq.s32.totalorder %s15, 0
    %p125 = por %p123, %p124
    %p126 = scmp.ne.s32.totalorder %s112, %s113
    %p127 = scmp.eq.s32.totalorder %s16, 1
    %p128 = por %p126, %p127
    %p130 = scmp.ne.s32.totalorder %s113, %s129
    %p131 = scmp.eq.s32.totalorder %s16, 0
    %p132 = por %p130, %p131
    %p133 = scmp.le.s32.totalorder 1, %s10
    %p134 = scmp.lt.s32.totalorder %s10, 3
    %p135 = pnand %p133, %p134
    %p136 = pneg %p135
    // Predicated region
    $region9: #{recurrent_gcn_forward.5} parent=5 // pred_check
      _
    $region10: #{recurrent_gcn_forward.5} parent=5 // pred_check_branch
      %138 = sbr.rel (%p135) target = $region12
    $region11: #{recurrent_gcn_forward.5} parent=5 // pred_region
      %s139 = ssub.s32 %s10, 1
      // Predicated region
      $region13: #{recurrent_gcn_forward.5} parent=11 // pred_check
        %p140 = pneg %p57
      $region14: #{recurrent_gcn_forward.5} parent=11 // pred_check_branch
        %142 = sbr.rel (%p140) target = $region16
      $region15: #{recurrent_gcn_forward.5} parent=11 // pred_region
        _
      $region16: #{recurrent_gcn_forward.5} parent=11 // pred_fallthru
        _
      // Predicated region
      $region17: #{recurrent_gcn_forward.5} parent=11 // pred_check
        %p143 = pneg %p78
      $region18: #{recurrent_gcn_forward.5} parent=11 // pred_check_branch
        %145 = sbr.rel (%p143) target = $region20
      $region19: #{recurrent_gcn_forward.5} parent=11 // pred_region
        _
      $region20: #{recurrent_gcn_forward.5} parent=11 // pred_fallthru
        _
      // Predicated region
      $region21: #{recurrent_gcn_forward.5} parent=11 // pred_check
        %p146 = pneg %p99
      $region22: #{recurrent_gcn_forward.5} parent=11 // pred_check_branch
        %148 = sbr.rel (%p146) target = $region24
      $region23: #{recurrent_gcn_forward.5} parent=11 // pred_region
        _
      $region24: #{recurrent_gcn_forward.5} parent=11 // pred_fallthru
        _
    $region12: #{recurrent_gcn_forward.5} parent=5 // pred_fallthru
      _
    %p149 = scmp.lt.s32.totalorder %s10, 2
    // Predicated region
    $region25: #{recurrent_gcn_forward.5} parent=5 // pred_check
      %p150 = pneg %p149
    $region26: #{recurrent_gcn_forward.5} parent=5 // pred_check_branch
      %152 = sbr.rel (%p150) target = $region28
    $region27: #{recurrent_gcn_forward.5} parent=5 // pred_region
      // Predicated region
      $region29: #{recurrent_gcn_forward.5} parent=27 // pred_check
        %p153 = pneg %p30
      $region30: #{recurrent_gcn_forward.5} parent=27 // pred_check_branch
        %155 = sbr.rel (%p153) target = $region32
      $region31: #{recurrent_gcn_forward.5} parent=27 // pred_region
        %s156 = smul.u32 4, %s10
        %p157 = scmp.lt.s32.totalorder %s156, 7
        %s158 = scalar_select %p157, %s156, 7
        %s159 = smul.addr %s158, 4
        %s160 = scalar_lea.vmem %s0, %s159
        %s161 = smul.u32 4, %s10
      $region32: #{recurrent_gcn_forward.5} parent=27 // pred_fallthru
        _
    $region28: #{recurrent_gcn_forward.5} parent=5 // pred_fallthru
      _
    %p162 = scmp.le.s32.totalorder 1, %s10
    %p163 = scmp.lt.s32.totalorder %s10, 3
    %p164 = pnand %p162, %p163
    %p165 = pneg %p164
    // Predicated region
    $region33: #{recurrent_gcn_forward.5} parent=5 // pred_check
      _
    $region34: #{recurrent_gcn_forward.5} parent=5 // pred_check_branch
      %167 = sbr.rel (%p164) target = $region36
    $region35: #{recurrent_gcn_forward.5} parent=5 // pred_region
      %s168 = ssub.s32 %s10, 1
      %s169 = smul.u32 4, %s15
      %p170 = scmp.lt.s32.totalorder %s169, 7
      %s171 = scalar_select %p170, %s169, 7
      %s172 = smul.addr %s171, 4
      %s173 = scalar_lea.vmem %s0, %s172
      %p174 = pneg %p36
      %p175 = pneg %p33
      %p176 = pneg %p57
      %p177 = pneg %p54
      %p178 = pneg %p78
      %p179 = pneg %p75
      %p180 = pneg %p99
      %p181 = pneg %p96
      %p182 = pneg %p125
      %p183 = pneg %p122
      %s184 = smul.u32 4, %s15
      %p185 = scmp.lt.s32.totalorder %s184, 7
      %s186 = scalar_select %p185, %s184, 7
      %s187 = smul.addr %s186, 8
      %s188 = scalar_lea.vmem %s4, %s187
      %s189 = smul.u32 4, %s15
      %p190 = scmp.lt.s32.totalorder %s189, 7
      %s191 = scalar_select %p190, %s189, 7
      %s192 = smul.addr %s191, 4
      %s193 = scalar_lea.vmem %s0, %s192
      %s194 = smul.u32 4, %s15
      %s195 = smul.u32 4, %s15
      %p196 = scmp.lt.s32.totalorder %s195, 7
      %s197 = scalar_select %p196, %s195, 7
      %s198 = smul.addr %s197, 8
      %s199 = scalar_lea.vmem %s4, %s198
      %s200 = smul.u32 4, %s15
      %v202 = vld [vmem:[%s193] sm:$0xf]
      %v203 = vld [vmem:[%s193 + $0x4] sm:$0xf]
      %v204 = vld [vmem:[%s193 + $0x8] sm:$0xf]
      %v205 = vld [vmem:[%s193 + $0xc] sm:$0xf]
      %v206 = vld [vmem:[%s1] sm:$0xf]
      %v207 = vld [vmem:[%s1 + $0x4] sm:$0xf]
      %v208 = vld [vmem:[%s1 + $0x8] sm:$0xf]
      %v209 = vld [vmem:[%s1 + $0xc] sm:$0xf]
      %v210 = vld [vmem:[%s1 + $0x10] sm:$0xf]
      %v211 = vld [vmem:[%s1 + $0x14] sm:$0xf]
      %v212 = vld [vmem:[%s1 + $0x18] sm:$0xf]
      %v213 = vld [vmem:[%s1 + $0x1c] sm:$0xf]
      %v218 = vunpack.c.l.b16 %v202
      %v219 = vunpack.c.l.b16 %v203
      %v220 = vunpack.c.l.b16 %v204
      %v221 = vunpack.c.l.b16 %v205
      %v222 = vpack.c.b16 %v219, %v218
      %v223 = vpack.c.b16 %v221, %v220
      %v232 = vunpack.c.l.b16 %v206
      %v233 = vunpack.c.l.b16 %v207
      %v234 = vunpack.c.l.b16 %v208
      %v235 = vunpack.c.l.b16 %v209
      %v236 = vunpack.c.l.b16 %v210
      %v237 = vunpack.c.l.b16 %v211
      %v238 = vunpack.c.l.b16 %v212
      %v239 = vunpack.c.l.b16 %v213
      %v240 = vpack.c.b16 %v233, %v232
      %v241 = vpack.c.b16 %v235, %v234
      %v242 = vpack.c.b16 %v237, %v236
      %v243 = vpack.c.b16 %v239, %v238
      %vm248 = vcmask 523264
      %v250 = vsel %vm248, %v222, 0
      %v253 = vsel %vm248, %v223, 0
      %255 = vmatprep.subr.bf16.mxu0 0
      %256 = vmatpush1.bf16.msra.mxu0 %v240
      %257 = vmatprep.subr.bf16.mxu0 0
      %258 = vmatpush1.bf16.msra.mxu0 %v241
      %259 = vmatprep.subr.bf16.mxu0 0
      %260 = vmatpush1.bf16.msra.mxu0 %v242
      %261 = vmatprep.subr.bf16.mxu0 0
      %262 = vmatpush1.bf16.msra.mxu0 %v243
      %263 = vmatprep.subr.bf16.mxu0 0
      %264 = vmatpush1.bf16.msra.mxu0 0
      %265 = vmatprep.subr.bf16.mxu0 0
      %266 = vmatpush1.bf16.msra.mxu0 0
      %267 = vmatprep.subr.bf16.mxu0 0
      %268 = vmatpush1.bf16.msra.mxu0 0
      %269 = vmatprep.subr.bf16.mxu0 0
      %270 = vmatpush1.bf16.msra.mxu0 0
      %271 = vmatprep.subr.bf16.mxu0 0
      %272 = vmatpush1.bf16.msra.mxu0 0
      %273 = vmatprep.subr.bf16.mxu0 0
      %274 = vmatpush1.bf16.msra.mxu0 0
      %275 = vmatprep.subr.bf16.mxu0 0
      %276 = vmatpush1.bf16.msra.mxu0 0
      %277 = vmatprep.subr.bf16.mxu0 0
      %278 = vmatpush1.bf16.msra.mxu0 0
      %279 = vmatprep.subr.bf16.mxu0 0
      %280 = vmatpush1.bf16.msra.mxu0 0
      %281 = vmatprep.subr.bf16.mxu0 0
      %282 = vmatpush1.bf16.msra.mxu0 0
      %283 = vmatprep.subr.bf16.mxu0 0
      %284 = vmatpush1.bf16.msra.mxu0 0
      %285 = vmatprep.subr.bf16.mxu0 0
      %286 = vmatpush1.bf16.msra.mxu0 0
      %287 = vmatprep.mubr.bf16.mxu0 0
      %288 = vmatmul.mubr.bf16.gmra.mrb[0].mxu0 %v250
      %v289 = vpop.f32.mrb[0].mxu0
      %v290 = vadd.f32 0.0, %v289
      %v291 = vpop.f32.mrb[0].mxu0
      %v292 = vpop.f32.mrb[0].mxu0
      %v293 = vadd.f32 0.0, %v292
      %v294 = vpop.f32.mrb[0].mxu0
      %295 = vmatprep.mubr.bf16.mxu0 0
      %296 = vmatmul.mubr.bf16.gmra.mrb[0].mxu0 %v253
      %v297 = vpop.f32.mrb[0].mxu0
      %v298 = vadd.f32 0.0, %v297
      %v299 = vpop.f32.mrb[0].mxu0
      %v300 = vpop.f32.mrb[0].mxu0
      %v301 = vadd.f32 0.0, %v300
      %v302 = vpop.f32.mrb[0].mxu0
      %303 = vdwg.mxu0
      %v304 = vmax.f32 %v290, 0.0
      %v305 = vmax.f32 %v293, 0.0
      %v306 = vmax.f32 %v298, 0.0
      %v307 = vmax.f32 %v301, 0.0
      %v308 = vpack.c.bf16 %v305, %v304
      %v309 = vpack.c.bf16 %v307, %v306
      %v310 = vld [vmem:[%s2] sm:$0xf]
      %v311 = vld [vmem:[%s2 + $0x4] sm:$0xf]
      %v312 = vld [vmem:[%s2 + $0x8] sm:$0xf]
      %v313 = vld [vmem:[%s2 + $0xc] sm:$0xf]
      %v314 = vld [vmem:[%s2 + $0x10] sm:$0xf]
      %v315 = vld [vmem:[%s2 + $0x14] sm:$0xf]
      %v316 = vld [vmem:[%s2 + $0x18] sm:$0xf]
      %v317 = vld [vmem:[%s2 + $0x1c] sm:$0xf]
      %v318 = vld [vmem:[%s2 + $0x20] sm:$0xf]
      %v319 = vld [vmem:[%s2 + $0x24] sm:$0xf]
      %v320 = vld [vmem:[%s2 + $0x28] sm:$0xf]
      %v321 = vld [vmem:[%s2 + $0x2c] sm:$0xf]
      %v322 = vld [vmem:[%s2 + $0x30] sm:$0xf]
      %v323 = vld [vmem:[%s2 + $0x34] sm:$0xf]
      %v324 = vld [vmem:[%s2 + $0x38] sm:$0xf]
      %v325 = vld [vmem:[%s2 + $0x3c] sm:$0xf]
      %v326 = vld [vmem:[%s3] sm:$0x1]
      %v328 = vlaneseq
      %v329 = vshrl.u32 %v328, 7
      %v330 = vsub.s32 0, %v329
      %v331 = vrot.slane %v326, %v330
      %v349 = vunpack.c.l.b16 %v310
      %v350 = vunpack.c.l.b16 %v311
      %v351 = vunpack.c.l.b16 %v312
      %v352 = vunpack.c.l.b16 %v313
      %v353 = vunpack.c.l.b16 %v314
      %v354 = vunpack.c.l.b16 %v315
      %v355 = vunpack.c.l.b16 %v316
      %v356 = vunpack.c.l.b16 %v317
      %v357 = vunpack.c.l.b16 %v318
      %v358 = vunpack.c.l.b16 %v319
      %v359 = vunpack.c.l.b16 %v320
      %v360 = vunpack.c.l.b16 %v321
      %v361 = vunpack.c.l.b16 %v322
      %v362 = vunpack.c.l.b16 %v323
      %v363 = vunpack.c.l.b16 %v324
      %v364 = vunpack.c.l.b16 %v325
      %v365 = vpack.c.b16 %v350, %v349
      %v366 = vpack.c.b16 %v352, %v351
      %v367 = vpack.c.b16 %v354, %v353
      %v368 = vpack.c.b16 %v356, %v355
      %v369 = vpack.c.b16 %v358, %v357
      %v370 = vpack.c.b16 %v360, %v359
      %v371 = vpack.c.b16 %v362, %v361
      %v372 = vpack.c.b16 %v364, %v363
      %381 = vmatprep.subr.bf16.mxu0 0
      %382 = vmatpush1.bf16.msra.mxu0 %v365
      %383 = vmatprep.subr.bf16.mxu0 0
      %384 = vmatpush1.bf16.msra.mxu0 %v366
      %385 = vmatprep.subr.bf16.mxu0 0
      %386 = vmatpush1.bf16.msra.mxu0 %v367
      %387 = vmatprep.subr.bf16.mxu0 0
      %388 = vmatpush1.bf16.msra.mxu0 %v368
      %389 = vmatprep.subr.bf16.mxu0 0
      %390 = vmatpush1.bf16.msra.mxu0 %v369
      %391 = vmatprep.subr.bf16.mxu0 0
      %392 = vmatpush1.bf16.msra.mxu0 %v370
      %393 = vmatprep.subr.bf16.mxu0 0
      %394 = vmatpush1.bf16.msra.mxu0 %v371
      %395 = vmatprep.subr.bf16.mxu0 0
      %396 = vmatpush1.bf16.msra.mxu0 %v372
      %397 = vmatprep.subr.bf16.mxu0 0
      %398 = vmatpush1.bf16.msra.mxu0 0
      %399 = vmatprep.subr.bf16.mxu0 0
      %400 = vmatpush1.bf16.msra.mxu0 0
      %401 = vmatprep.subr.bf16.mxu0 0
      %402 = vmatpush1.bf16.msra.mxu0 0
      %403 = vmatprep.subr.bf16.mxu0 0
      %404 = vmatpush1.bf16.msra.mxu0 0
      %405 = vmatprep.subr.bf16.mxu0 0
      %406 = vmatpush1.bf16.msra.mxu0 0
      %407 = vmatprep.subr.bf16.mxu0 0
      %408 = vmatpush1.bf16.msra.mxu0 0
      %409 = vmatprep.subr.bf16.mxu0 0
      %410 = vmatpush1.bf16.msra.mxu0 0
      %411 = vmatprep.subr.bf16.mxu0 0
      %412 = vmatpush1.bf16.msra.mxu0 0
      %413 = vmatprep.mubr.bf16.mxu0 0
      %414 = vmatmul.mubr.bf16.gmra.mrb[0].mxu0 %v308
      %v415 = vpop.f32.mrb[0].mxu0
      %v416 = vadd.f32 %v331, %v415
      %v417 = vpop.f32.mrb[0].mxu0
      %v418 = vpop.f32.mrb[0].mxu0
      %v419 = vadd.f32 %v331, %v418
      %v420 = vpop.f32.mrb[0].mxu0
      %421 = vmatprep.mubr.bf16.mxu0 0
      %422 = vmatmul.mubr.bf16.gmra.mrb[0].mxu0 %v309
      %v423 = vpop.f32.mrb[0].mxu0
      %v424 = vadd.f32 %v331, %v423
      %v425 = vpop.f32.mrb[0].mxu0
      %v426 = vpop.f32.mrb[0].mxu0
      %v427 = vadd.f32 %v331, %v426
      %v428 = vpop.f32.mrb[0].mxu0
      %429 = vdwg.mxu0
      %430 = vmax.xlane.f32.xlu0 %v416
      %v431 = vpop.xlane.xlu0 %430
      %432 = vmax.xlane.f32.xlu0 %v419
      %v433 = vpop.xlane.xlu0 %432
      %434 = vmax.xlane.f32.xlu0 %v424
      %v435 = vpop.xlane.xlu0 %434
      %436 = vmax.xlane.f32.xlu0 %v427
      %v437 = vpop.xlane.xlu0 %436
      %v438 = vsub.f32 %v416, %v431
      %v439 = vsub.f32 %v419, %v433
      %v440 = vsub.f32 %v424, %v435
      %v441 = vsub.f32 %v427, %v437
      %v442 = vmul.f32 %v438, 1.442695
      %v443 = vpow.pop %v442
      %v444 = vmul.f32 %v439, 1.442695
      %v445 = vpow.pop %v444
      %v446 = vmul.f32 %v440, 1.442695
      %v447 = vpow.pop %v446
      %v448 = vmul.f32 %v441, 1.442695
      %v449 = vpow.pop %v448
      %450 = vadd.xlane.f32.xlu0 %v443
      %v451 = vpop.xlane.xlu0 %450
      %452 = vadd.xlane.f32.xlu0 %v445
      %v453 = vpop.xlane.xlu0 %452
      %454 = vadd.xlane.f32.xlu0 %v447
      %v455 = vpop.xlane.xlu0 %454
      %456 = vadd.xlane.f32.xlu0 %v449
      %v457 = vpop.xlane.xlu0 %456
      %v458 = vlog2.pop %v451
      %v459 = vmul.f32 %v458, 0.6931472
      %v460 = vlog2.pop %v453
      %v461 = vmul.f32 %v460, 0.6931472
      %v462 = vlog2.pop %v455
      %v463 = vmul.f32 %v462, 0.6931472
      %v464 = vlog2.pop %v457
      %v465 = vmul.f32 %v464, 0.6931472
      %v466 = vsub.f32 %v438, %v459
      %v467 = vsub.f32 %v439, %v461
      %v468 = vsub.f32 %v440, %v463
      %v469 = vsub.f32 %v441, %v465
      %470 = vst [vmem:[%s199] sm:$0xff] %v466
      %471 = vst [vmem:[%s199 + $0x8] sm:$0xff] %v467
      %472 = vst [vmem:[%s199 + $0x10] sm:$0xff] %v468
      %473 = vst [vmem:[%s199 + $0x18] sm:$0xff] %v469
      %s474 = smul.u32 4, %s15
      %p475 = scmp.lt.s32.totalorder %s474, 7
      %s476 = scalar_select %p475, %s474, 7
      %s477 = smul.addr %s476, 8
      %s478 = scalar_lea.vmem %s4, %s477
      // Predicated region
      $region37: #{recurrent_gcn_forward.5} parent=35 // pred_check
        %p479 = pneg %p122
      $region38: #{recurrent_gcn_forward.5} parent=35 // pred_check_branch
        %481 = sbr.rel (%p479) target = $region40
      $region39: #{recurrent_gcn_forward.5} parent=35 // pred_region
        %s482 = smul.u32 4, %s15
      $region40: #{recurrent_gcn_forward.5} parent=35 // pred_fallthru
        _
    $region36: #{recurrent_gcn_forward.5} parent=5 // pred_fallthru
      _
    %p483 = scmp.le.s32.totalorder 2, %s10
    // Predicated region
    $region41: #{recurrent_gcn_forward.5} parent=5 // pred_check
      %p484 = pneg %p483
    $region42: #{recurrent_gcn_forward.5} parent=5 // pred_check_branch
      %486 = sbr.rel (%p484) target = $region44
    $region43: #{recurrent_gcn_forward.5} parent=5 // pred_region
      %s487 = ssub.s32 %s10, 2
      // Predicated region
      $region45: #{recurrent_gcn_forward.5} parent=43 // pred_check
        %p488 = pneg %p128
      $region46: #{recurrent_gcn_forward.5} parent=43 // pred_check_branch
        %490 = sbr.rel (%p488) target = $region48
      $region47: #{recurrent_gcn_forward.5} parent=43 // pred_region
        %s491 = smul.u32 4, %s16
        %p492 = scmp.lt.s32.totalorder %s491, 7
        %s493 = scalar_select %p492, %s491, 7
        %s494 = smul.addr %s493, 8
        %s495 = scalar_lea.vmem %s4, %s494
      $region48: #{recurrent_gcn_forward.5} parent=43 // pred_fallthru
        _
    $region44: #{recurrent_gcn_forward.5} parent=5 // pred_fallthru
      _
  $region6: #{recurrent_gcn_forward.5} parent=0 // loop_footer
    %s14 = sadd.s32 1, %s10
  $region7: #{recurrent_gcn_forward.5} parent=0 // loop_footer_branch
    %9 = sbr.rel target = $region3
  $region8: #{recurrent_gcn_forward.5} parent=0 // loop_exit
    _

// kernel: recurrent_gcn_forward.4
$region0: #{recurrent_gcn_forward.4}
  #allocation0 [shape = 'u32[]', space=smem, size = 0x4, offset = 0x4, fixed_abs, tag = 'smem constant byte address 0x4 - core index']
  #allocation1 [shape = 'u32[144,128]{1,0:T(1,128)}', space=vmem, size = 0x12000, scoped, tag = 'internal scratch']
  %s0 = inlined_call_operand.vmem [shape: bf16[64,64], index: 0, kind: input, shape index: {}]
  %s1 = inlined_call_operand.vmem [shape: bf16[64,128], index: 1, kind: input, shape index: {}]
  %s2 = inlined_call_operand.vmem [shape: bf16[2,128,128], index: 2, kind: input, shape index: {}]
  %s3 = inlined_call_operand.vmem [shape: bf16[64,128], index: 3, kind: output, shape index: {}]
  %s4 = sld [smem:[#allocation0]]
  $region45: #{recurrent_gcn_forward.4} parent=0
    _
  %s6 = ssub.s32 1, %s4
  %s7 = scalar_select 0, %s6, %s4
  loop: start=0, step=1, limit=4
  $region2: #{recurrent_gcn_forward.4} parent=0 // loop_pre_header
    _
  $region3: #{recurrent_gcn_forward.4} parent=0 // loop_header
    %s9 = sphi 0, %s13
    %p10 = scmp.ge.s32.totalorder %s9, 4
    %s19 = sphi 0, %s21
    %s22 = sphi 0, %s19
    %s23 = sphi 0, %s22
    %s39 = sphi 0, %s23
    %s43 = sphi 0, %s43
    %s45 = sphi 0, %s43
    %s46 = sphi 0, %s45
    %s60 = sphi 0, %s46
    %s64 = sphi 0, %s64
    %s66 = sphi 0, %s64
    %s67 = sphi 0, %s66
    %s81 = sphi 0, %s67
    %s87 = sphi 0, %s89
    %s90 = sphi 0, %s87
    %s91 = sphi 0, %s90
    %s107 = sphi 0, %s91
  $region4: #{recurrent_gcn_forward.4} parent=0 // loop_header_branch
    %12 = sbr.rel (%p10) target = $region8
  $region5: #{recurrent_gcn_forward.4} parent=0 // loop_body
    %s14 = ssub.s32 %s9, 1
    %s15 = ssub.s32 %s9, 2
    %s16 = sadd.s32 %s9, 1
    %s17 = ssub.s32 %s9, %s16
    %p18 = scmp.eq.s32.totalorder %s17, 0
    %s20 = sadd.s32 %s19, 1
    %s21 = scalar_select %p18, %s19, %s20
    %p24 = pneg %p18
    %p25 = scmp.eq.s32.totalorder %s9, 1
    %p26 = por %p24, %p25
    %p27 = scmp.ne.s32.totalorder %s19, %s22
    %p28 = scmp.eq.s32.totalorder %s9, 0
    %p29 = por %p27, %p28
    %p30 = scmp.ne.s32.totalorder %s19, %s22
    %p31 = scmp.eq.s32.totalorder %s14, 1
    %p32 = por %p30, %p31
    %p33 = scmp.ne.s32.totalorder %s22, %s23
    %p34 = scmp.eq.s32.totalorder %s14, 0
    %p35 = por %p33, %p34
    %p36 = scmp.ne.s32.totalorder %s22, %s23
    %p37 = scmp.eq.s32.totalorder %s15, 1
    %p38 = por %p36, %p37
    %p40 = scmp.ne.s32.totalorder %s23, %s39
    %p41 = scmp.eq.s32.totalorder %s15, 0
    %p42 = por %p40, %p41
    %s44 = sadd.s32 %s43, 1
    %p47 = scmp.eq.s32.totalorder %s9, 1
    %p48 = scmp.ne.s32.totalorder %s43, %s45
    %p49 = scmp.eq.s32.totalorder %s9, 0
    %p50 = por %p48, %p49
    %p51 = scmp.ne.s32.totalorder %s43, %s45
    %p52 = scmp.eq.s32.totalorder %s14, 1
    %p53 = por %p51, %p52
    %p54 = scmp.ne.s32.totalorder %s45, %s46
    %p55 = scmp.eq.s32.totalorder %s14, 0
    %p56 = por %p54, %p55
    %p57 = scmp.ne.s32.totalorder %s45, %s46
    %p58 = scmp.eq.s32.totalorder %s15, 1
    %p59 = por %p57, %p58
    %p61 = scmp.ne.s32.totalorder %s46, %s60
    %p62 = scmp.eq.s32.totalorder %s15, 0
    %p63 = por %p61, %p62
    %s65 = sadd.s32 %s64, 1
    %p68 = scmp.eq.s32.totalorder %s9, 1
    %p69 = scmp.ne.s32.totalorder %s64, %s66
    %p70 = scmp.eq.s32.totalorder %s9, 0
    %p71 = por %p69, %p70
    %p72 = scmp.ne.s32.totalorder %s64, %s66
    %p73 = scmp.eq.s32.totalorder %s14, 1
    %p74 = por %p72, %p73
    %p75 = scmp.ne.s32.totalorder %s66, %s67
    %p76 = scmp.eq.s32.totalorder %s14, 0
    %p77 = por %p75, %p76
    %p78 = scmp.ne.s32.totalorder %s66, %s67
    %p79 = scmp.eq.s32.totalorder %s15, 1
    %p80 = por %p78, %p79
    %p82 = scmp.ne.s32.totalorder %s67, %s81
    %p83 = scmp.eq.s32.totalorder %s15, 0
    %p84 = por %p82, %p83
    %s85 = ssub.s32 %s9, %s16
    %p86 = scmp.eq.s32.totalorder %s85, 0
    %s88 = sadd.s32 %s87, 1
    %s89 = scalar_select %p86, %s87, %s88
    %p92 = pneg %p86
    %p93 = scmp.eq.s32.totalorder %s9, 1
    %p94 = por %p92, %p93
    %p95 = scmp.ne.s32.totalorder %s87, %s90
    %p96 = scmp.eq.s32.totalorder %s9, 0
    %p97 = por %p95, %p96
    %p98 = scmp.ne.s32.totalorder %s87, %s90
    %p99 = scmp.eq.s32.totalorder %s14, 1
    %p100 = por %p98, %p99
    %p101 = scmp.ne.s32.totalorder %s90, %s91
    %p102 = scmp.eq.s32.totalorder %s14, 0
    %p103 = por %p101, %p102
    %p104 = scmp.ne.s32.totalorder %s90, %s91
    %p105 = scmp.eq.s32.totalorder %s15, 1
    %p106 = por %p104, %p105
    %p108 = scmp.ne.s32.totalorder %s91, %s107
    %p109 = scmp.eq.s32.totalorder %s15, 0
    %p110 = por %p108, %p109
    %p111 = scmp.le.s32.totalorder 1, %s9
    %p112 = scmp.lt.s32.totalorder %s9, 3
    %p113 = pnand %p111, %p112
    %p114 = pneg %p113
    // Predicated region
    $region9: #{recurrent_gcn_forward.4} parent=5 // pred_check
      _
    $region10: #{recurrent_gcn_forward.4} parent=5 // pred_check_branch
      %116 = sbr.rel (%p113) target = $region12
    $region11: #{recurrent_gcn_forward.4} parent=5 // pred_region
      %s117 = ssub.s32 %s9, 1
      // Predicated region
      $region13: #{recurrent_gcn_forward.4} parent=11 // pred_check
        %p118 = pneg %p56
      $region14: #{recurrent_gcn_forward.4} parent=11 // pred_check_branch
        %120 = sbr.rel (%p118) target = $region16
      $region15: #{recurrent_gcn_forward.4} parent=11 // pred_region
        _
      $region16: #{recurrent_gcn_forward.4} parent=11 // pred_fallthru
        _
      // Predicated region
      $region17: #{recurrent_gcn_forward.4} parent=11 // pred_check
        %p121 = pneg %p77
      $region18: #{recurrent_gcn_forward.4} parent=11 // pred_check_branch
        %123 = sbr.rel (%p121) target = $region20
      $region19: #{recurrent_gcn_forward.4} parent=11 // pred_region
        _
      $region20: #{recurrent_gcn_forward.4} parent=11 // pred_fallthru
        _
    $region12: #{recurrent_gcn_forward.4} parent=5 // pred_fallthru
      _
    %p124 = scmp.lt.s32.totalorder %s9, 2
    // Predicated region
    $region21: #{recurrent_gcn_forward.4} parent=5 // pred_check
      %p125 = pneg %p124
    $region22: #{recurrent_gcn_forward.4} parent=5 // pred_check_branch
      %127 = sbr.rel (%p125) target = $region24
    $region23: #{recurrent_gcn_forward.4} parent=5 // pred_region
      // Predicated region
      $region25: #{recurrent_gcn_forward.4} parent=23 // pred_check
        %p128 = pneg %p29
      $region26: #{recurrent_gcn_forward.4} parent=23 // pred_check_branch
        %130 = sbr.rel (%p128) target = $region28
      $region27: #{recurrent_gcn_forward.4} parent=23 // pred_region
        %s131 = smul.u32 4, %s9
        %p132 = scmp.lt.s32.totalorder %s131, 7
        %s133 = scalar_select %p132, %s131, 7
        %s134 = smul.addr %s133, 4
        %s135 = scalar_lea.vmem %s0, %s134
        %s136 = smul.u32 4, %s9
      $region28: #{recurrent_gcn_forward.4} parent=23 // pred_fallthru
        _
    $region24: #{recurrent_gcn_forward.4} parent=5 // pred_fallthru
      _
    %p137 = scmp.le.s32.totalorder 1, %s9
    %p138 = scmp.lt.s32.totalorder %s9, 3
    %p139 = pnand %p137, %p138
    %p140 = pneg %p139
    // Predicated region
    $region29: #{recurrent_gcn_forward.4} parent=5 // pred_check
      _
    $region30: #{recurrent_gcn_forward.4} parent=5 // pred_check_branch
      %142 = sbr.rel (%p139) target = $region32
    $region31: #{recurrent_gcn_forward.4} parent=5 // pred_region
      %s143 = ssub.s32 %s9, 1
      %s144 = smul.u32 4, %s14
      %p145 = scmp.lt.s32.totalorder %s144, 7
      %s146 = scalar_select %p145, %s144, 7
      %s147 = smul.addr %s146, 4
      %s148 = scalar_lea.vmem %s0, %s147
      %p149 = pneg %p35
      %p150 = pneg %p32
      %p151 = pneg %p56
      %p152 = pneg %p53
      %p153 = pneg %p77
      %p154 = pneg %p74
      %p155 = pneg %p103
      %p156 = pneg %p100
      %s157 = smul.u32 4, %s14
      %p158 = scmp.lt.s32.totalorder %s157, 7
      %s159 = scalar_select %p158, %s157, 7
      %s160 = smul.addr %s159, 4
      %s161 = scalar_lea.vmem %s3, %s160
      %s162 = smul.u32 4, %s14
      %p163 = scmp.lt.s32.totalorder %s162, 7
      %s164 = scalar_select %p163, %s162, 7
      %s165 = smul.addr %s164, 4
      %s166 = scalar_lea.vmem %s0, %s165
      %s167 = smul.u32 4, %s14
      %s168 = smul.u32 4, %s14
      %p169 = scmp.lt.s32.totalorder %s168, 7
      %s170 = scalar_select %p169, %s168, 7
      %s171 = smul.addr %s170, 4
      %s172 = scalar_lea.vmem %s3, %s171
      %s173 = smul.u32 4, %s14
      %v175 = vld [vmem:[%s166] sm:$0xf]
      %v176 = vld [vmem:[%s166 + $0x4] sm:$0xf]
      %v177 = vld [vmem:[%s166 + $0x8] sm:$0xf]
      %v178 = vld [vmem:[%s166 + $0xc] sm:$0xf]
      %v179 = vld [vmem:[%s1] sm:$0xf]
      %v180 = vld [vmem:[%s1 + $0x4] sm:$0xf]
      %v181 = vld [vmem:[%s1 + $0x8] sm:$0xf]
      %v182 = vld [vmem:[%s1 + $0xc] sm:$0xf]
      %v183 = vld [vmem:[%s1 + $0x10] sm:$0xf]
      %v184 = vld [vmem:[%s1 + $0x14] sm:$0xf]
      %v185 = vld [vmem:[%s1 + $0x18] sm:$0xf]
      %v186 = vld [vmem:[%s1 + $0x1c] sm:$0xf]
      %v191 = vunpack.c.l.b16 %v175
      %v192 = vunpack.c.l.b16 %v176
      %v193 = vunpack.c.l.b16 %v177
      %v194 = vunpack.c.l.b16 %v178
      %v195 = vpack.c.b16 %v192, %v191
      %v196 = vpack.c.b16 %v194, %v193
      %v205 = vunpack.c.l.b16 %v179
      %v206 = vunpack.c.l.b16 %v180
      %v207 = vunpack.c.l.b16 %v181
      %v208 = vunpack.c.l.b16 %v182
      %v209 = vunpack.c.l.b16 %v183
      %v210 = vunpack.c.l.b16 %v184
      %v211 = vunpack.c.l.b16 %v185
      %v212 = vunpack.c.l.b16 %v186
      %v213 = vpack.c.b16 %v206, %v205
      %v214 = vpack.c.b16 %v208, %v207
      %v215 = vpack.c.b16 %v210, %v209
      %v216 = vpack.c.b16 %v212, %v211
      %vm221 = vcmask 523264
      %v223 = vsel %vm221, %v195, 0
      %v226 = vsel %vm221, %v196, 0
      %228 = vmatprep.subr.bf16.mxu0 0
      %229 = vmatpush1.bf16.msra.mxu0 %v213
      %230 = vmatprep.subr.bf16.mxu0 0
      %231 = vmatpush1.bf16.msra.mxu0 %v214
      %232 = vmatprep.subr.bf16.mxu0 0
      %233 = vmatpush1.bf16.msra.mxu0 %v215
      %234 = vmatprep.subr.bf16.mxu0 0
      %235 = vmatpush1.bf16.msra.mxu0 %v216
      %236 = vmatprep.subr.bf16.mxu0 0
      %237 = vmatpush1.bf16.msra.mxu0 0
      %238 = vmatprep.subr.bf16.mxu0 0
      %239 = vmatpush1.bf16.msra.mxu0 0
      %240 = vmatprep.subr.bf16.mxu0 0
      %241 = vmatpush1.bf16.msra.mxu0 0
      %242 = vmatprep.subr.bf16.mxu0 0
      %243 = vmatpush1.bf16.msra.mxu0 0
      %244 = vmatprep.subr.bf16.mxu0 0
      %245 = vmatpush1.bf16.msra.mxu0 0
      %246 = vmatprep.subr.bf16.mxu0 0
      %247 = vmatpush1.bf16.msra.mxu0 0
      %248 = vmatprep.subr.bf16.mxu0 0
      %249 = vmatpush1.bf16.msra.mxu0 0
      %250 = vmatprep.subr.bf16.mxu0 0
      %251 = vmatpush1.bf16.msra.mxu0 0
      %252 = vmatprep.subr.bf16.mxu0 0
      %253 = vmatpush1.bf16.msra.mxu0 0
      %254 = vmatprep.subr.bf16.mxu0 0
      %255 = vmatpush1.bf16.msra.mxu0 0
      %256 = vmatprep.subr.bf16.mxu0 0
      %257 = vmatpush1.bf16.msra.mxu0 0
      %258 = vmatprep.subr.bf16.mxu0 0
      %259 = vmatpush1.bf16.msra.mxu0 0
      %260 = vmatprep.mubr.bf16.mxu0 0
      %261 = vmatmul.mubr.bf16.gmra.mrb[0].mxu0 %v223
      %v262 = vpop.f32.mrb[0].mxu0
      %v263 = vadd.f32 0.0, %v262
      %v264 = vpop.f32.mrb[0].mxu0
      %v265 = vpop.f32.mrb[0].mxu0
      %v266 = vadd.f32 0.0, %v265
      %v267 = vpop.f32.mrb[0].mxu0
      %268 = vmatprep.mubr.bf16.mxu0 0
      %269 = vmatmul.mubr.bf16.gmra.mrb[0].mxu0 %v226
      %v270 = vpop.f32.mrb[0].mxu0
      %v271 = vadd.f32 0.0, %v270
      %v272 = vpop.f32.mrb[0].mxu0
      %v273 = vpop.f32.mrb[0].mxu0
      %v274 = vadd.f32 0.0, %v273
      %v275 = vpop.f32.mrb[0].mxu0
      %276 = vdwg.mxu0
      %v277 = vpack.c.bf16 %v266, %v263
      %v278 = vpack.c.bf16 %v274, %v271
      %v279 = vld [vmem:[%s2] sm:$0xf]
      %v280 = vld [vmem:[%s2 + $0x4] sm:$0xf]
      %v281 = vld [vmem:[%s2 + $0x8] sm:$0xf]
      %v282 = vld [vmem:[%s2 + $0xc] sm:$0xf]
      %v283 = vld [vmem:[%s2 + $0x10] sm:$0xf]
      %v284 = vld [vmem:[%s2 + $0x14] sm:$0xf]
      %v285 = vld [vmem:[%s2 + $0x18] sm:$0xf]
      %v286 = vld [vmem:[%s2 + $0x1c] sm:$0xf]
      %v287 = vld [vmem:[%s2 + $0x20] sm:$0xf]
      %v288 = vld [vmem:[%s2 + $0x24] sm:$0xf]
      %v289 = vld [vmem:[%s2 + $0x28] sm:$0xf]
      %v290 = vld [vmem:[%s2 + $0x2c] sm:$0xf]
      %v291 = vld [vmem:[%s2 + $0x30] sm:$0xf]
      %v292 = vld [vmem:[%s2 + $0x34] sm:$0xf]
      %v293 = vld [vmem:[%s2 + $0x38] sm:$0xf]
      %v294 = vld [vmem:[%s2 + $0x3c] sm:$0xf]
      %v311 = vunpack.c.l.b16 %v279
      %v312 = vunpack.c.l.b16 %v280
      %v313 = vunpack.c.l.b16 %v281
      %v314 = vunpack.c.l.b16 %v282
      %v315 = vunpack.c.l.b16 %v283
      %v316 = vunpack.c.l.b16 %v284
      %v317 = vunpack.c.l.b16 %v285
      %v318 = vunpack.c.l.b16 %v286
      %v319 = vunpack.c.l.b16 %v287
      %v320 = vunpack.c.l.b16 %v288
      %v321 = vunpack.c.l.b16 %v289
      %v322 = vunpack.c.l.b16 %v290
      %v323 = vunpack.c.l.b16 %v291
      %v324 = vunpack.c.l.b16 %v292
      %v325 = vunpack.c.l.b16 %v293
      %v326 = vunpack.c.l.b16 %v294
      %v327 = vpack.c.b16 %v312, %v311
      %v328 = vpack.c.b16 %v314, %v313
      %v329 = vpack.c.b16 %v316, %v315
      %v330 = vpack.c.b16 %v318, %v317
      %v331 = vpack.c.b16 %v320, %v319
      %v332 = vpack.c.b16 %v322, %v321
      %v333 = vpack.c.b16 %v324, %v323
      %v334 = vpack.c.b16 %v326, %v325
      %343 = vmatprep.subr.bf16.mxu0 0
      %344 = vmatpush1.bf16.msra.mxu0 %v327
      %345 = vmatprep.subr.bf16.mxu0 0
      %346 = vmatpush1.bf16.msra.mxu0 %v328
      %347 = vmatprep.subr.bf16.mxu0 0
      %348 = vmatpush1.bf16.msra.mxu0 %v329
      %349 = vmatprep.subr.bf16.mxu0 0
      %350 = vmatpush1.bf16.msra.mxu0 %v330
      %351 = vmatprep.subr.bf16.mxu0 0
      %352 = vmatpush1.bf16.msra.mxu0 %v331
      %353 = vmatprep.subr.bf16.mxu0 0
      %354 = vmatpush1.bf16.msra.mxu0 %v332
      %355 = vmatprep.subr.bf16.mxu0 0
      %356 = vmatpush1.bf16.msra.mxu0 %v333
      %357 = vmatprep.subr.bf16.mxu0 0
      %358 = vmatpush1.bf16.msra.mxu0 %v334
      %359 = vmatprep.subr.bf16.mxu0 0
      %360 = vmatpush1.bf16.msra.mxu0 0
      %361 = vmatprep.subr.bf16.mxu0 0
      %362 = vmatpush1.bf16.msra.mxu0 0
      %363 = vmatprep.subr.bf16.mxu0 0
      %364 = vmatpush1.bf16.msra.mxu0 0
      %365 = vmatprep.subr.bf16.mxu0 0
      %366 = vmatpush1.bf16.msra.mxu0 0
      %367 = vmatprep.subr.bf16.mxu0 0
      %368 = vmatpush1.bf16.msra.mxu0 0
      %369 = vmatprep.subr.bf16.mxu0 0
      %370 = vmatpush1.bf16.msra.mxu0 0
      %371 = vmatprep.subr.bf16.mxu0 0
      %372 = vmatpush1.bf16.msra.mxu0 0
      %373 = vmatprep.subr.bf16.mxu0 0
      %374 = vmatpush1.bf16.msra.mxu0 0
      %375 = vmatprep.mubr.bf16.mxu0 0
      %376 = vmatmul.mubr.bf16.gmra.mrb[0].mxu0 %v277
      %v377 = vpop.f32.mrb[0].mxu0
      %v378 = vadd.f32 0.0, %v377
      %v379 = vpop.f32.mrb[0].mxu0
      %v380 = vpop.f32.mrb[0].mxu0
      %v381 = vadd.f32 0.0, %v380
      %v382 = vpop.f32.mrb[0].mxu0
      %383 = vmatprep.mubr.bf16.mxu0 0
      %384 = vmatmul.mubr.bf16.gmra.mrb[0].mxu0 %v278
      %v385 = vpop.f32.mrb[0].mxu0
      %v386 = vadd.f32 0.0, %v385
      %v387 = vpop.f32.mrb[0].mxu0
      %v388 = vpop.f32.mrb[0].mxu0
      %v389 = vadd.f32 0.0, %v388
      %v390 = vpop.f32.mrb[0].mxu0
      %391 = vdwg.mxu0
      %v392 = vmax.f32 %v378, 0.0
      %v393 = vmax.f32 %v381, 0.0
      %v394 = vmax.f32 %v386, 0.0
      %v395 = vmax.f32 %v389, 0.0
      %v396 = vpack.c.bf16 %v393, %v392
      %v397 = vpack.c.bf16 %v395, %v394
      %s398 = scalar_lea.vmem %s2, 64
      %v399 = vld [vmem:[%s398] sm:$0xf]
      %v400 = vld [vmem:[%s398 + $0x4] sm:$0xf]
      %v401 = vld [vmem:[%s398 + $0x8] sm:$0xf]
      %v402 = vld [vmem:[%s398 + $0xc] sm:$0xf]
      %v403 = vld [vmem:[%s398 + $0x10] sm:$0xf]
      %v404 = vld [vmem:[%s398 + $0x14] sm:$0xf]
      %v405 = vld [vmem:[%s398 + $0x18] sm:$0xf]
      %v406 = vld [vmem:[%s398 + $0x1c] sm:$0xf]
      %v407 = vld [vmem:[%s398 + $0x20] sm:$0xf]
      %v408 = vld [vmem:[%s398 + $0x24] sm:$0xf]
      %v409 = vld [vmem:[%s398 + $0x28] sm:$0xf]
      %v410 = vld [vmem:[%s398 + $0x2c] sm:$0xf]
      %v411 = vld [vmem:[%s398 + $0x30] sm:$0xf]
      %v412 = vld [vmem:[%s398 + $0x34] sm:$0xf]
      %v413 = vld [vmem:[%s398 + $0x38] sm:$0xf]
      %v414 = vld [vmem:[%s398 + $0x3c] sm:$0xf]
      %v431 = vunpack.c.l.b16 %v399
      %v432 = vunpack.c.l.b16 %v400
      %v433 = vunpack.c.l.b16 %v401
      %v434 = vunpack.c.l.b16 %v402
      %v435 = vunpack.c.l.b16 %v403
      %v436 = vunpack.c.l.b16 %v404
      %v437 = vunpack.c.l.b16 %v405
      %v438 = vunpack.c.l.b16 %v406
      %v439 = vunpack.c.l.b16 %v407
      %v440 = vunpack.c.l.b16 %v408
      %v441 = vunpack.c.l.b16 %v409
      %v442 = vunpack.c.l.b16 %v410
      %v443 = vunpack.c.l.b16 %v411
      %v444 = vunpack.c.l.b16 %v412
      %v445 = vunpack.c.l.b16 %v413
      %v446 = vunpack.c.l.b16 %v414
      %v447 = vpack.c.b16 %v432, %v431
      %v448 = vpack.c.b16 %v434, %v433
      %v449 = vpack.c.b16 %v436, %v435
      %v450 = vpack.c.b16 %v438, %v437
      %v451 = vpack.c.b16 %v440, %v439
      %v452 = vpack.c.b16 %v442, %v441
      %v453 = vpack.c.b16 %v444, %v443
      %v454 = vpack.c.b16 %v446, %v445
      %463 = vmatprep.subr.bf16.mxu0 0
      %464 = vmatpush1.bf16.msra.mxu0 %v447
      %465 = vmatprep.subr.bf16.mxu0 0
      %466 = vmatpush1.bf16.msra.mxu0 %v448
      %467 = vmatprep.subr.bf16.mxu0 0
      %468 = vmatpush1.bf16.msra.mxu0 %v449
      %469 = vmatprep.subr.bf16.mxu0 0
      %470 = vmatpush1.bf16.msra.mxu0 %v450
      %471 = vmatprep.subr.bf16.mxu0 0
      %472 = vmatpush1.bf16.msra.mxu0 %v451
      %473 = vmatprep.subr.bf16.mxu0 0
      %474 = vmatpush1.bf16.msra.mxu0 %v452
      %475 = vmatprep.subr.bf16.mxu0 0
      %476 = vmatpush1.bf16.msra.mxu0 %v453
      %477 = vmatprep.subr.bf16.mxu0 0
      %478 = vmatpush1.bf16.msra.mxu0 %v454
      %479 = vmatprep.subr.bf16.mxu0 0
      %480 = vmatpush1.bf16.msra.mxu0 0
      %481 = vmatprep.subr.bf16.mxu0 0
      %482 = vmatpush1.bf16.msra.mxu0 0
      %483 = vmatprep.subr.bf16.mxu0 0
      %484 = vmatpush1.bf16.msra.mxu0 0
      %485 = vmatprep.subr.bf16.mxu0 0
      %486 = vmatpush1.bf16.msra.mxu0 0
      %487 = vmatprep.subr.bf16.mxu0 0
      %488 = vmatpush1.bf16.msra.mxu0 0
      %489 = vmatprep.subr.bf16.mxu0 0
      %490 = vmatpush1.bf16.msra.mxu0 0
      %491 = vmatprep.subr.bf16.mxu0 0
      %492 = vmatpush1.bf16.msra.mxu0 0
      %493 = vmatprep.subr.bf16.mxu0 0
      %494 = vmatpush1.bf16.msra.mxu0 0
      %495 = vmatprep.mubr.bf16.mxu0 0
      %496 = vmatmul.mubr.bf16.gmra.mrb[0].mxu0 %v396
      %v497 = vpop.f32.mrb[0].mxu0
      %v498 = vadd.f32 0.0, %v497
      %v499 = vpop.f32.mrb[0].mxu0
      %v500 = vpop.f32.mrb[0].mxu0
      %v501 = vadd.f32 0.0, %v500
      %v502 = vpop.f32.mrb[0].mxu0
      %503 = vmatprep.mubr.bf16.mxu0 0
      %504 = vmatmul.mubr.bf16.gmra.mrb[0].mxu0 %v397
      %v505 = vpop.f32.mrb[0].mxu0
      %v506 = vadd.f32 0.0, %v505
      %v507 = vpop.f32.mrb[0].mxu0
      %v508 = vpop.f32.mrb[0].mxu0
      %v509 = vadd.f32 0.0, %v508
      %v510 = vpop.f32.mrb[0].mxu0
      %511 = vdwg.mxu0
      %v512 = vpack.c.bf16 %v501, %v498
      %v513 = vpack.c.bf16 %v509, %v506
      %v516 = vunpack.c.l.b16 %v512
      %v517 = vunpack.c.h.b16 %v512
      %v518 = vunpack.c.l.b16 %v513
      %v519 = vunpack.c.h.b16 %v513
      %v520 = vpack.c.b16 %v516, %v516
      %v521 = vpack.c.b16 %v517, %v517
      %v522 = vpack.c.b16 %v518, %v518
      %v523 = vpack.c.b16 %v519, %v519
      %528 = vst [vmem:[%s172] sm:$0xf] %v520
      %529 = vst [vmem:[%s172 + $0x4] sm:$0xf] %v521
      %530 = vst [vmem:[%s172 + $0x8] sm:$0xf] %v522
      %531 = vst [vmem:[%s172 + $0xc] sm:$0xf] %v523
      %s532 = smul.u32 4, %s14
      %p533 = scmp.lt.s32.totalorder %s532, 7
      %s534 = scalar_select %p533, %s532, 7
      %s535 = smul.addr %s534, 4
      %s536 = scalar_lea.vmem %s3, %s535
      // Predicated region
      $region33: #{recurrent_gcn_forward.4} parent=31 // pred_check
        %p537 = pneg %p100
      $region34: #{recurrent_gcn_forward.4} parent=31 // pred_check_branch
        %539 = sbr.rel (%p537) target = $region36
      $region35: #{recurrent_gcn_forward.4} parent=31 // pred_region
        %s540 = smul.u32 4, %s14
      $region36: #{recurrent_gcn_forward.4} parent=31 // pred_fallthru
        _
    $region32: #{recurrent_gcn_forward.4} parent=5 // pred_fallthru
      _
    %p541 = scmp.le.s32.totalorder 2, %s9
    // Predicated region
    $region37: #{recurrent_gcn_forward.4} parent=5 // pred_check
      %p542 = pneg %p541
    $region38: #{recurrent_gcn_forward.4} parent=5 // pred_check_branch
      %544 = sbr.rel (%p542) target = $region40
    $region39: #{recurrent_gcn_forward.4} parent=5 // pred_region
      %s545 = ssub.s32 %s9, 2
      // Predicated region
      $region41: #{recurrent_gcn_forward.4} parent=39 // pred_check
        %p546 = pneg %p106
      $region42: #{recurrent_gcn_forward.4} parent=39 // pred_check_branch
        %548 = sbr.rel (%p546) target = $region44
      $region43: #{recurrent_gcn_forward.4} parent=39 // pred_region
        %s549 = smul.u32 4, %s15
        %p550 = scmp.lt.s32.totalorder %s549, 7
        %s551 = scalar_select %p550, %s549, 7
        %s552 = smul.addr %s551, 4
        %s553 = scalar_lea.vmem %s3, %s552
      $region44: #{recurrent_gcn_forward.4} parent=39 // pred_fallthru
        _
    $region40: #{recurrent_gcn_forward.4} parent=5 // pred_fallthru
      _
  $region6: #{recurrent_gcn_forward.4} parent=0 // loop_footer
    %s13 = sadd.s32 1, %s9
  $region7: #{recurrent_gcn_forward.4} parent=0 // loop_footer_branch
    %8 = sbr.rel target = $region3
  $region8: #{recurrent_gcn_forward.4} parent=0 // loop_exit
    _

// kernel: recurrent_gcn_forward.3
$region0: #{recurrent_gcn_forward.3}
  #allocation0 [shape = 'u32[]', space=smem, size = 0x4, offset = 0x4, fixed_abs, tag = 'smem constant byte address 0x4 - core index']
  #allocation1 [shape = 'u32[144,128]{1,0:T(1,128)}', space=vmem, size = 0x12000, scoped, tag = 'internal scratch']
  %s0 = inlined_call_operand.vmem [shape: f32[2,128,128], index: 0, kind: input, shape index: {}]
  %s1 = inlined_call_operand.vmem [shape: bf16[2,128,768], index: 1, kind: input, shape index: {}]
  %s2 = inlined_call_operand.vmem [shape: f32[2,1,768], index: 2, kind: input, shape index: {}]
  %s3 = inlined_call_operand.vmem [shape: f32[2,128,128], index: 3, kind: output, shape index: {}]
  %s4 = sld [smem:[#allocation0]]
  $region45: #{recurrent_gcn_forward.3} parent=0
    _
  %s6 = ssub.s32 1, %s4
  %s7 = scalar_select 0, %s6, %s4
  loop: start=0, step=1, limit=4
  $region2: #{recurrent_gcn_forward.3} parent=0 // loop_pre_header
    _
  $region3: #{recurrent_gcn_forward.3} parent=0 // loop_header
    %s9 = sphi 0, %s13
    %p10 = scmp.ge.s32.totalorder %s9, 4
    %s19 = sphi 0, %s21
    %s22 = sphi 0, %s19
    %s23 = sphi 0, %s22
    %s39 = sphi 0, %s23
    %s45 = sphi 0, %s47
    %s48 = sphi 0, %s45
    %s49 = sphi 0, %s48
    %s65 = sphi 0, %s49
    %s71 = sphi 0, %s73
    %s74 = sphi 0, %s71
    %s75 = sphi 0, %s74
    %s91 = sphi 0, %s75
    %s97 = sphi 0, %s99
    %s100 = sphi 0, %s97
    %s101 = sphi 0, %s100
    %s117 = sphi 0, %s101
  $region4: #{recurrent_gcn_forward.3} parent=0 // loop_header_branch
    %12 = sbr.rel (%p10) target = $region8
  $region5: #{recurrent_gcn_forward.3} parent=0 // loop_body
    %s14 = ssub.s32 %s9, 1
    %s15 = ssub.s32 %s9, 2
    %s16 = sadd.s32 %s9, 1
    %s17 = ssub.s32 %s9, %s16
    %p18 = scmp.eq.s32.totalorder %s17, 0
    %s20 = sadd.s32 %s19, 1
    %s21 = scalar_select %p18, %s19, %s20
    %p24 = pneg %p18
    %p25 = scmp.eq.s32.totalorder %s9, 1
    %p26 = por %p24, %p25
    %p27 = scmp.ne.s32.totalorder %s19, %s22
    %p28 = scmp.eq.s32.totalorder %s9, 0
    %p29 = por %p27, %p28
    %p30 = scmp.ne.s32.totalorder %s19, %s22
    %p31 = scmp.eq.s32.totalorder %s14, 1
    %p32 = por %p30, %p31
    %p33 = scmp.ne.s32.totalorder %s22, %s23
    %p34 = scmp.eq.s32.totalorder %s14, 0
    %p35 = por %p33, %p34
    %p36 = scmp.ne.s32.totalorder %s22, %s23
    %p37 = scmp.eq.s32.totalorder %s15, 1
    %p38 = por %p36, %p37
    %p40 = scmp.ne.s32.totalorder %s23, %s39
    %p41 = scmp.eq.s32.totalorder %s15, 0
    %p42 = por %p40, %p41
    %s43 = ssub.s32 %s9, %s16
    %p44 = scmp.eq.s32.totalorder %s43, 0
    %s46 = sadd.s32 %s45, 1
    %s47 = scalar_select %p44, %s45, %s46
    %p50 = pneg %p44
    %p51 = scmp.eq.s32.totalorder %s9, 1
    %p52 = por %p50, %p51
    %p53 = scmp.ne.s32.totalorder %s45, %s48
    %p54 = scmp.eq.s32.totalorder %s9, 0
    %p55 = por %p53, %p54
    %p56 = scmp.ne.s32.totalorder %s45, %s48
    %p57 = scmp.eq.s32.totalorder %s14, 1
    %p58 = por %p56, %p57
    %p59 = scmp.ne.s32.totalorder %s48, %s49
    %p60 = scmp.eq.s32.totalorder %s14, 0
    %p61 = por %p59, %p60
    %p62 = scmp.ne.s32.totalorder %s48, %s49
    %p63 = scmp.eq.s32.totalorder %s15, 1
    %p64 = por %p62, %p63
    %p66 = scmp.ne.s32.totalorder %s49, %s65
    %p67 = scmp.eq.s32.totalorder %s15, 0
    %p68 = por %p66, %p67
    %s69 = ssub.s32 %s9, %s16
    %p70 = scmp.eq.s32.totalorder %s69, 0
    %s72 = sadd.s32 %s71, 1
    %s73 = scalar_select %p70, %s71, %s72
    %p76 = pneg %p70
    %p77 = scmp.eq.s32.totalorder %s9, 1
    %p78 = por %p76, %p77
    %p79 = scmp.ne.s32.totalorder %s71, %s74
    %p80 = scmp.eq.s32.totalorder %s9, 0
    %p81 = por %p79, %p80
    %p82 = scmp.ne.s32.totalorder %s71, %s74
    %p83 = scmp.eq.s32.totalorder %s14, 1
    %p84 = por %p82, %p83
    %p85 = scmp.ne.s32.totalorder %s74, %s75
    %p86 = scmp.eq.s32.totalorder %s14, 0
    %p87 = por %p85, %p86
    %p88 = scmp.ne.s32.totalorder %s74, %s75
    %p89 = scmp.eq.s32.totalorder %s15, 1
    %p90 = por %p88, %p89
    %p92 = scmp.ne.s32.totalorder %s75, %s91
    %p93 = scmp.eq.s32.totalorder %s15, 0
    %p94 = por %p92, %p93
    %s95 = ssub.s32 %s9, %s16
    %p96 = scmp.eq.s32.totalorder %s95, 0
    %s98 = sadd.s32 %s97, 1
    %s99 = scalar_select %p96, %s97, %s98
    %p102 = pneg %p96
    %p103 = scmp.eq.s32.totalorder %s9, 1
    %p104 = por %p102, %p103
    %p105 = scmp.ne.s32.totalorder %s97, %s100
    %p106 = scmp.eq.s32.totalorder %s9, 0
    %p107 = por %p105, %p106
    %p108 = scmp.ne.s32.totalorder %s97, %s100
    %p109 = scmp.eq.s32.totalorder %s14, 1
    %p110 = por %p108, %p109
    %p111 = scmp.ne.s32.totalorder %s100, %s101
    %p112 = scmp.eq.s32.totalorder %s14, 0
    %p113 = por %p111, %p112
    %p114 = scmp.ne.s32.totalorder %s100, %s101
    %p115 = scmp.eq.s32.totalorder %s15, 1
    %p116 = por %p114, %p115
    %p118 = scmp.ne.s32.totalorder %s101, %s117
    %p119 = scmp.eq.s32.totalorder %s15, 0
    %p120 = por %p118, %p119
    %p121 = scmp.le.s32.totalorder 1, %s9
    %p122 = scmp.lt.s32.totalorder %s9, 3
    %p123 = pnand %p121, %p122
    %p124 = pneg %p123
    // Predicated region
    $region9: #{recurrent_gcn_forward.3} parent=5 // pred_check
      _
    $region10: #{recurrent_gcn_forward.3} parent=5 // pred_check_branch
      %126 = sbr.rel (%p123) target = $region12
    $region11: #{recurrent_gcn_forward.3} parent=5 // pred_region
      %s127 = ssub.s32 %s9, 1
    $region12: #{recurrent_gcn_forward.3} parent=5 // pred_fallthru
      _
    %p128 = scmp.lt.s32.totalorder %s9, 2
    // Predicated region
    $region13: #{recurrent_gcn_forward.3} parent=5 // pred_check
      %p129 = pneg %p128
    $region14: #{recurrent_gcn_forward.3} parent=5 // pred_check_branch
      %131 = sbr.rel (%p129) target = $region16
    $region15: #{recurrent_gcn_forward.3} parent=5 // pred_region
      // Predicated region
      $region17: #{recurrent_gcn_forward.3} parent=15 // pred_check
        %p132 = pneg %p29
      $region18: #{recurrent_gcn_forward.3} parent=15 // pred_check_branch
        %134 = sbr.rel (%p132) target = $region20
      $region19: #{recurrent_gcn_forward.3} parent=15 // pred_region
        %p135 = scmp.lt.s32.totalorder %s9, 1
        %s136 = scalar_select %p135, %s9, 1
        %s137 = smul.addr %s136, 16
        %s138 = smul.addr %s137, 8
        %s139 = scalar_lea.vmem %s0, %s138
      $region20: #{recurrent_gcn_forward.3} parent=15 // pred_fallthru
        _
      // Predicated region
      $region21: #{recurrent_gcn_forward.3} parent=15 // pred_check
        %p140 = pneg %p55
      $region22: #{recurrent_gcn_forward.3} parent=15 // pred_check_branch
        %142 = sbr.rel (%p140) target = $region24
      $region23: #{recurrent_gcn_forward.3} parent=15 // pred_region
        %p143 = scmp.lt.s32.totalorder %s9, 1
        %s144 = scalar_select %p143, %s9, 1
        %s145 = smul.addr %s144, 96
        %s146 = smul.addr %s145, 4
        %s147 = scalar_lea.vmem %s1, %s146
      $region24: #{recurrent_gcn_forward.3} parent=15 // pred_fallthru
        _
      // Predicated region
      $region25: #{recurrent_gcn_forward.3} parent=15 // pred_check
        %p148 = pneg %p81
      $region26: #{recurrent_gcn_forward.3} parent=15 // pred_check_branch
        %150 = sbr.rel (%p148) target = $region28
      $region27: #{recurrent_gcn_forward.3} parent=15 // pred_region
        %p151 = scmp.lt.s32.totalorder %s9, 1
        %s152 = scalar_select %p151, %s9, 1
        %s153 = smul.addr %s152, 6
        %s154 = scalar_lea.vmem %s2, %s153
      $region28: #{recurrent_gcn_forward.3} parent=15 // pred_fallthru
        _
    $region16: #{recurrent_gcn_forward.3} parent=5 // pred_fallthru
      _
    %p155 = scmp.le.s32.totalorder 1, %s9
    %p156 = scmp.lt.s32.totalorder %s9, 3
    %p157 = pnand %p155, %p156
    %p158 = pneg %p157
    // Predicated region
    $region29: #{recurrent_gcn_forward.3} parent=5 // pred_check
      _
    $region30: #{recurrent_gcn_forward.3} parent=5 // pred_check_branch
      %160 = sbr.rel (%p157) target = $region32
    $region31: #{recurrent_gcn_forward.3} parent=5 // pred_region
      %s161 = ssub.s32 %s9, 1
      %p162 = scmp.lt.s32.totalorder %s14, 1
      %s163 = scalar_select %p162, %s14, 1
      %s164 = smul.addr %s163, 16
      %s165 = smul.addr %s164, 8
      %s166 = scalar_lea.vmem %s0, %s165
      %p167 = pneg %p35
      %p168 = pneg %p32
      %p169 = scmp.lt.s32.totalorder %s14, 1
      %s170 = scalar_select %p169, %s14, 1
      %s171 = smul.addr %s170, 96
      %s172 = smul.addr %s171, 4
      %s173 = scalar_lea.vmem %s1, %s172
      %p174 = pneg %p61
      %p175 = pneg %p58
      %p176 = scmp.lt.s32.totalorder %s14, 1
      %s177 = scalar_select %p176, %s14, 1
      %s178 = smul.addr %s177, 6
      %s179 = scalar_lea.vmem %s2, %s178
      %p180 = pneg %p87
      %p181 = pneg %p84
      %p182 = pneg %p113
      %p183 = pneg %p110
      %p184 = scmp.lt.s32.totalorder %s14, 1
      %s185 = scalar_select %p184, %s14, 1
      %s186 = smul.addr %s185, 16
      %s187 = smul.addr %s186, 8
      %s188 = scalar_lea.vmem %s3, %s187
      %p189 = scmp.lt.s32.totalorder %s14, 1
      %s190 = scalar_select %p189, %s14, 1
      %s191 = smul.addr %s190, 16
      %s192 = smul.addr %s191, 8
      %s193 = scalar_lea.vmem %s0, %s192
      %p194 = scmp.lt.s32.totalorder %s14, 1
      %s195 = scalar_select %p194, %s14, 1
      %s196 = smul.addr %s195, 96
      %s197 = smul.addr %s196, 4
      %s198 = scalar_lea.vmem %s1, %s197
      %p199 = scmp.lt.s32.totalorder %s14, 1
      %s200 = scalar_select %p199, %s14, 1
      %s201 = smul.addr %s200, 6
      %s202 = scalar_lea.vmem %s2, %s201
      %p203 = scmp.lt.s32.totalorder %s14, 1
      %s204 = scalar_select %p203, %s14, 1
      %s205 = smul.addr %s204, 16
      %s206 = smul.addr %s205, 8
      %s207 = scalar_lea.vmem %s3, %s206
      %v209 = vld [vmem:[%s193] sm:$0xff]
      %v210 = vld [vmem:[%s193 + $0x8] sm:$0xff]
      %v211 = vld [vmem:[%s193 + $0x10] sm:$0xff]
      %v212 = vld [vmem:[%s193 + $0x18] sm:$0xff]
      %v213 = vld [vmem:[%s193 + $0x20] sm:$0xff]
      %v214 = vld [vmem:[%s193 + $0x28] sm:$0xff]
      %v215 = vld [vmem:[%s193 + $0x30] sm:$0xff]
      %v216 = vld [vmem:[%s193 + $0x38] sm:$0xff]
      %v217 = vld [vmem:[%s193 + $0x40] sm:$0xff]
      %v218 = vld [vmem:[%s193 + $0x48] sm:$0xff]
      %v219 = vld [vmem:[%s193 + $0x50] sm:$0xff]
      %v220 = vld [vmem:[%s193 + $0x58] sm:$0xff]
      %v221 = vld [vmem:[%s193 + $0x60] sm:$0xff]
      %v222 = vld [vmem:[%s193 + $0x68] sm:$0xff]
      %v223 = vld [vmem:[%s193 + $0x70] sm:$0xff]
      %v224 = vld [vmem:[%s193 + $0x78] sm:$0xff]
      %v225 = vpack.c.bf16 %v210, %v209
      %v226 = vpack.c.bf16 %v212, %v211
      %v227 = vpack.c.bf16 %v214, %v213
      %v228 = vpack.c.bf16 %v216, %v215
      %v229 = vpack.c.bf16 %v218, %v217
      %v230 = vpack.c.bf16 %v220, %v219
      %v231 = vpack.c.bf16 %v222, %v221
      %v232 = vpack.c.bf16 %v224, %v223
      %v233 = vld [vmem:[%s198] sm:$0xff]
      %v234 = vld [vmem:[%s198 + $0x8] sm:$0xff]
      %v235 = vld [vmem:[%s198 + $0x10] sm:$0xff]
      %v236 = vld [vmem:[%s198 + $0x18] sm:$0xff]
      %v237 = vld [vmem:[%s198 + $0x20] sm:$0xff]
      %v238 = vld [vmem:[%s198 + $0x28] sm:$0xff]
      %v239 = vld [vmem:[%s198 + $0x30] sm:$0xff]
      %v240 = vld [vmem:[%s198 + $0x38] sm:$0xff]
      %v241 = vld [vmem:[%s198 + $0x40] sm:$0xff]
      %v242 = vld [vmem:[%s198 + $0x48] sm:$0xff]
      %v243 = vld [vmem:[%s198 + $0x50] sm:$0xff]
      %v244 = vld [vmem:[%s198 + $0x58] sm:$0xff]
      %v245 = vld [vmem:[%s198 + $0x60] sm:$0xff]
      %v246 = vld [vmem:[%s198 + $0x68] sm:$0xff]
      %v247 = vld [vmem:[%s198 + $0x70] sm:$0xff]
      %v248 = vld [vmem:[%s198 + $0x78] sm:$0xff]
      %v249 = vld [vmem:[%s198 + $0x80] sm:$0xff]
      %v250 = vld [vmem:[%s198 + $0x88] sm:$0xff]
      %v251 = vld [vmem:[%s198 + $0x90] sm:$0xff]
      %v252 = vld [vmem:[%s198 + $0x98] sm:$0xff]
      %v253 = vld [vmem:[%s198 + $0xa0] sm:$0xff]
      %v254 = vld [vmem:[%s198 + $0xa8] sm:$0xff]
      %v255 = vld [vmem:[%s198 + $0xb0] sm:$0xff]
      %v256 = vld [vmem:[%s198 + $0xb8] sm:$0xff]
      %v257 = vld [vmem:[%s198 + $0xc0] sm:$0xff]
      %v258 = vld [vmem:[%s198 + $0xc8] sm:$0xff]
      %v259 = vld [vmem:[%s198 + $0xd0] sm:$0xff]
      %v260 = vld [vmem:[%s198 + $0xd8] sm:$0xff]
      %v261 = vld [vmem:[%s198 + $0xe0] sm:$0xff]
      %v262 = vld [vmem:[%s198 + $0xe8] sm:$0xff]
      %v263 = vld [vmem:[%s198 + $0xf0] sm:$0xff]
      %v264 = vld [vmem:[%s198 + $0xf8] sm:$0xff]
      %v265 = vld [vmem:[%s198 + $0x100] sm:$0xff]
      %v266 = vld [vmem:[%s198 + $0x108] sm:$0xff]
      %v267 = vld [vmem:[%s198 + $0x110] sm:$0xff]
      %v268 = vld [vmem:[%s198 + $0x118] sm:$0xff]
      %v269 = vld [vmem:[%s198 + $0x120] sm:$0xff]
      %v270 = vld [vmem:[%s198 + $0x128] sm:$0xff]
      %v271 = vld [vmem:[%s198 + $0x130] sm:$0xff]
      %v272 = vld [vmem:[%s198 + $0x138] sm:$0xff]
      %v273 = vld [vmem:[%s198 + $0x140] sm:$0xff]
      %v274 = vld [vmem:[%s198 + $0x148] sm:$0xff]
      %v275 = vld [vmem:[%s198 + $0x150] sm:$0xff]
      %v276 = vld [vmem:[%s198 + $0x158] sm:$0xff]
      %v277 = vld [vmem:[%s198 + $0x160] sm:$0xff]
      %v278 = vld [vmem:[%s198 + $0x168] sm:$0xff]
      %v279 = vld [vmem:[%s198 + $0x170] sm:$0xff]
      %v280 = vld [vmem:[%s198 + $0x178] sm:$0xff]
      %v281 = vld [vmem:[%s202] sm:$0x3f]
      %v283 = vlaneseq
      %v284 = vshrl.u32 %v283, 7
      %v285 = vsub.s32 0, %v284
      %v286 = vrot.slane %v281, %v285
      %v287 = vlaneseq
      %v288 = vshrl.u32 %v287, 7
      %v289 = vsub.s32 1, %v288
      %v290 = vrot.slane %v281, %v289
      %v291 = vlaneseq
      %v292 = vshrl.u32 %v291, 7
      %v293 = vsub.s32 2, %v292
      %v294 = vrot.slane %v281, %v293
      %v295 = vlaneseq
      %v296 = vshrl.u32 %v295, 7
      %v297 = vsub.s32 3, %v296
      %v298 = vrot.slane %v281, %v297
      %v299 = vlaneseq
      %v300 = vshrl.u32 %v299, 7
      %v301 = vsub.s32 4, %v300
      %v302 = vrot.slane %v281, %v301
      %v303 = vlaneseq
      %v304 = vshrl.u32 %v303, 7
      %v305 = vsub.s32 5, %v304
      %v306 = vrot.slane %v281, %v305
      %v361 = vunpack.c.l.b16 %v233
      %v362 = vunpack.c.h.b16 %v233
      %v363 = vunpack.c.l.b16 %v234
      %v364 = vunpack.c.h.b16 %v234
      %v365 = vunpack.c.l.b16 %v235
      %v366 = vunpack.c.h.b16 %v235
      %v367 = vunpack.c.l.b16 %v236
      %v368 = vunpack.c.h.b16 %v236
      %v369 = vunpack.c.l.b16 %v237
      %v370 = vunpack.c.h.b16 %v237
      %v371 = vunpack.c.l.b16 %v238
      %v372 = vunpack.c.h.b16 %v238
      %v373 = vunpack.c.l.b16 %v239
      %v374 = vunpack.c.h.b16 %v239
      %v375 = vunpack.c.l.b16 %v240
      %v376 = vunpack.c.h.b16 %v240
      %v377 = vunpack.c.l.b16 %v241
      %v378 = vunpack.c.h.b16 %v241
      %v379 = vunpack.c.l.b16 %v242
      %v380 = vunpack.c.h.b16 %v242
      %v381 = vunpack.c.l.b16 %v243
      %v382 = vunpack.c.h.b16 %v243
      %v383 = vunpack.c.l.b16 %v244
      %v384 = vunpack.c.h.b16 %v244
      %v385 = vunpack.c.l.b16 %v245
      %v386 = vunpack.c.h.b16 %v245
      %v387 = vunpack.c.l.b16 %v246
      %v388 = vunpack.c.h.b16 %v246
      %v389 = vunpack.c.l.b16 %v247
      %v390 = vunpack.c.h.b16 %v247
      %v391 = vunpack.c.l.b16 %v248
      %v392 = vunpack.c.h.b16 %v248
      %v393 = vunpack.c.l.b16 %v249
      %v394 = vunpack.c.h.b16 %v249
      %v395 = vunpack.c.l.b16 %v250
      %v396 = vunpack.c.h.b16 %v250
      %v397 = vunpack.c.l.b16 %v251
      %v398 = vunpack.c.h.b16 %v251
      %v399 = vunpack.c.l.b16 %v252
      %v400 = vunpack.c.h.b16 %v252
      %v401 = vunpack.c.l.b16 %v253
      %v402 = vunpack.c.h.b16 %v253
      %v403 = vunpack.c.l.b16 %v254
      %v404 = vunpack.c.h.b16 %v254
      %v405 = vunpack.c.l.b16 %v255
      %v406 = vunpack.c.h.b16 %v255
      %v407 = vunpack.c.l.b16 %v256
      %v408 = vunpack.c.h.b16 %v256
      %v409 = vunpack.c.l.b16 %v257
      %v410 = vunpack.c.h.b16 %v257
      %v411 = vunpack.c.l.b16 %v258
      %v412 = vunpack.c.h.b16 %v258
      %v413 = vunpack.c.l.b16 %v259
      %v414 = vunpack.c.h.b16 %v259
      %v415 = vunpack.c.l.b16 %v260
      %v416 = vunpack.c.h.b16 %v260
      %v417 = vunpack.c.l.b16 %v261
      %v418 = vunpack.c.h.b16 %v261
      %v419 = vunpack.c.l.b16 %v262
      %v420 = vunpack.c.h.b16 %v262
      %v421 = vunpack.c.l.b16 %v263
      %v422 = vunpack.c.h.b16 %v263
      %v423 = vunpack.c.l.b16 %v264
      %v424 = vunpack.c.h.b16 %v264
      %v425 = vunpack.c.l.b16 %v265
      %v426 = vunpack.c.h.b16 %v265
      %v427 = vunpack.c.l.b16 %v266
      %v428 = vunpack.c.h.b16 %v266
      %v429 = vunpack.c.l.b16 %v267
      %v430 = vunpack.c.h.b16 %v267
      %v431 = vunpack.c.l.b16 %v268
      %v432 = vunpack.c.h.b16 %v268
      %v433 = vunpack.c.l.b16 %v269
      %v434 = vunpack.c.h.b16 %v269
      %v435 = vunpack.c.l.b16 %v270
      %v436 = vunpack.c.h.b16 %v270
      %v437 = vunpack.c.l.b16 %v271
      %v438 = vunpack.c.h.b16 %v271
      %v439 = vunpack.c.l.b16 %v272
      %v440 = vunpack.c.h.b16 %v272
      %v441 = vunpack.c.l.b16 %v273
      %v442 = vunpack.c.h.b16 %v273
      %v443 = vunpack.c.l.b16 %v274
      %v444 = vunpack.c.h.b16 %v274
      %v445 = vunpack.c.l.b16 %v275
      %v446 = vunpack.c.h.b16 %v275
      %v447 = vunpack.c.l.b16 %v276
      %v448 = vunpack.c.h.b16 %v276
      %v449 = vunpack.c.l.b16 %v277
      %v450 = vunpack.c.h.b16 %v277
      %v451 = vunpack.c.l.b16 %v278
      %v452 = vunpack.c.h.b16 %v278
      %v453 = vunpack.c.l.b16 %v279
      %v454 = vunpack.c.h.b16 %v279
      %v455 = vunpack.c.l.b16 %v280
      %v456 = vunpack.c.h.b16 %v280
      %v457 = vpack.c.b16 %v367, %v361
      %v458 = vpack.c.b16 %v368, %v362
      %v459 = vpack.c.b16 %v369, %v363
      %v460 = vpack.c.b16 %v370, %v364
      %v461 = vpack.c.b16 %v371, %v365
      %v462 = vpack.c.b16 %v372, %v366
      %v463 = vpack.c.b16 %v379, %v373
      %v464 = vpack.c.b16 %v380, %v374
      %v465 = vpack.c.b16 %v381, %v375
      %v466 = vpack.c.b16 %v382, %v376
      %v467 = vpack.c.b16 %v383, %v377
      %v468 = vpack.c.b16 %v384, %v378
      %v469 = vpack.c.b16 %v391, %v385
      %v470 = vpack.c.b16 %v392, %v386
      %v471 = vpack.c.b16 %v393, %v387
      %v472 = vpack.c.b16 %v394, %v388
      %v473 = vpack.c.b16 %v395, %v389
      %v474 = vpack.c.b16 %v396, %v390
      %v475 = vpack.c.b16 %v403, %v397
      %v476 = vpack.c.b16 %v404, %v398
      %v477 = vpack.c.b16 %v405, %v399
      %v478 = vpack.c.b16 %v406, %v400
      %v479 = vpack.c.b16 %v407, %v401
      %v480 = vpack.c.b16 %v408, %v402
      %v481 = vpack.c.b16 %v415, %v409
      %v482 = vpack.c.b16 %v416, %v410
      %v483 = vpack.c.b16 %v417, %v411
      %v484 = vpack.c.b16 %v418, %v412
      %v485 = vpack.c.b16 %v419, %v413
      %v486 = vpack.c.b16 %v420, %v414
      %v487 = vpack.c.b16 %v427, %v421
      %v488 = vpack.c.b16 %v428, %v422
      %v489 = vpack.c.b16 %v429, %v423
      %v490 = vpack.c.b16 %v430, %v424
      %v491 = vpack.c.b16 %v431, %v425
      %v492 = vpack.c.b16 %v432, %v426
      %v493 = vpack.c.b16 %v439, %v433
      %v494 = vpack.c.b16 %v440, %v434
      %v495 = vpack.c.b16 %v441, %v435
      %v496 = vpack.c.b16 %v442, %v436
      %v497 = vpack.c.b16 %v443, %v437
      %v498 = vpack.c.b16 %v444, %v438
      %v499 = vpack.c.b16 %v451, %v445
      %v500 = vpack.c.b16 %v452, %v446
      %v501 = vpack.c.b16 %v453, %v447
      %v502 = vpack.c.b16 %v454, %v448
      %v503 = vpack.c.b16 %v455, %v449
      %v504 = vpack.c.b16 %v456, %v450
      %553 = vmatprep.subr.bf16.mxu0 %v458
      %554 = vmatpush1.bf16.msra.mxu0 %v457
      %555 = vmatprep.subr.bf16.mxu0 %v464
      %556 = vmatpush1.bf16.msra.mxu0 %v463
      %557 = vmatprep.subr.bf16.mxu0 %v470
      %558 = vmatpush1.bf16.msra.mxu0 %v469
      %559 = vmatprep.subr.bf16.mxu0 %v476
      %560 = vmatpush1.bf16.msra.mxu0 %v475
      %561 = vmatprep.subr.bf16.mxu0 %v482
      %562 = vmatpush1.bf16.msra.mxu0 %v481
      %563 = vmatprep.subr.bf16.mxu0 %v488
      %564 = vmatpush1.bf16.msra.mxu0 %v487
      %565 = vmatprep.subr.bf16.mxu0 %v494
      %566 = vmatpush1.bf16.msra.mxu0 %v493
      %567 = vmatprep.subr.bf16.mxu0 %v500
      %568 = vmatpush1.bf16.msra.mxu0 %v499
      %569 = vmatprep.subr.bf16.mxu0 0
      %570 = vmatpush1.bf16.msra.mxu0 0
      %571 = vmatprep.subr.bf16.mxu0 0
      %572 = vmatpush1.bf16.msra.mxu0 0
      %573 = vmatprep.subr.bf16.mxu0 0
      %574 = vmatpush1.bf16.msra.mxu0 0
      %575 = vmatprep.subr.bf16.mxu0 0
      %576 = vmatpush1.bf16.msra.mxu0 0
      %577 = vmatprep.subr.bf16.mxu0 0
      %578 = vmatpush1.bf16.msra.mxu0 0
      %579 = vmatprep.subr.bf16.mxu0 0
      %580 = vmatpush1.bf16.msra.mxu0 0
      %581 = vmatprep.subr.bf16.mxu0 0
      %582 = vmatpush1.bf16.msra.mxu0 0
      %583 = vmatprep.subr.bf16.mxu0 0
      %584 = vmatpush1.bf16.msra.mxu0 0
      %585 = vmatprep.mubr.bf16.mxu0 0
      %586 = vmatmul.mubr.bf16.gmra.mrb[0].mxu0 %v225
      %v587 = vpop.f32.mrb[0].mxu0
      %v588 = vadd.f32 %v286, %v587
      %v589 = vpop.f32.mrb[0].mxu0
      %v590 = vadd.f32 %v290, %v589
      %v591 = vpop.f32.mrb[0].mxu0
      %v592 = vadd.f32 %v286, %v591
      %v593 = vpop.f32.mrb[0].mxu0
      %v594 = vadd.f32 %v290, %v593
      %595 = vmatprep.mubr.bf16.mxu0 0
      %596 = vmatmul.mubr.bf16.gmra.mrb[0].mxu0 %v226
      %v597 = vpop.f32.mrb[0].mxu0
      %v598 = vadd.f32 %v286, %v597
      %v599 = vpop.f32.mrb[0].mxu0
      %v600 = vadd.f32 %v290, %v599
      %v601 = vpop.f32.mrb[0].mxu0
      %v602 = vadd.f32 %v286, %v601
      %v603 = vpop.f32.mrb[0].mxu0
      %v604 = vadd.f32 %v290, %v603
      %605 = vmatprep.mubr.bf16.mxu0 0
      %606 = vmatmul.mubr.bf16.gmra.mrb[0].mxu0 %v227
      %v607 = vpop.f32.mrb[0].mxu0
      %v608 = vadd.f32 %v286, %v607
      %v609 = vpop.f32.mrb[0].mxu0
      %v610 = vadd.f32 %v290, %v609
      %v611 = vpop.f32.mrb[0].mxu0
      %v612 = vadd.f32 %v286, %v611
      %v613 = vpop.f32.mrb[0].mxu0
      %v614 = vadd.f32 %v290, %v613
      %615 = vmatprep.mubr.bf16.mxu0 0
      %616 = vmatmul.mubr.bf16.gmra.mrb[0].mxu0 %v228
      %v617 = vpop.f32.mrb[0].mxu0
      %v618 = vadd.f32 %v286, %v617
      %v619 = vpop.f32.mrb[0].mxu0
      %v620 = vadd.f32 %v290, %v619
      %v621 = vpop.f32.mrb[0].mxu0
      %v622 = vadd.f32 %v286, %v621
      %v623 = vpop.f32.mrb[0].mxu0
      %v624 = vadd.f32 %v290, %v623
      %625 = vmatprep.mubr.bf16.mxu0 0
      %626 = vmatmul.mubr.bf16.gmra.mrb[0].mxu0 %v229
      %v627 = vpop.f32.mrb[0].mxu0
      %v628 = vadd.f32 %v286, %v627
      %v629 = vpop.f32.mrb[0].mxu0
      %v630 = vadd.f32 %v290, %v629
      %v631 = vpop.f32.mrb[0].mxu0
      %v632 = vadd.f32 %v286, %v631
      %v633 = vpop.f32.mrb[0].mxu0
      %v634 = vadd.f32 %v290, %v633
      %635 = vmatprep.mubr.bf16.mxu0 0
      %636 = vmatmul.mubr.bf16.gmra.mrb[0].mxu0 %v230
      %v637 = vpop.f32.mrb[0].mxu0
      %v638 = vadd.f32 %v286, %v637
      %v639 = vpop.f32.mrb[0].mxu0
      %v640 = vadd.f32 %v290, %v639
      %v641 = vpop.f32.mrb[0].mxu0
      %v642 = vadd.f32 %v286, %v641
      %v643 = vpop.f32.mrb[0].mxu0
      %v644 = vadd.f32 %v290, %v643
      %645 = vmatprep.mubr.bf16.mxu0 0
      %646 = vmatmul.mubr.bf16.gmra.mrb[0].mxu0 %v231
      %v647 = vpop.f32.mrb[0].mxu0
      %v648 = vadd.f32 %v286, %v647
      %v649 = vpop.f32.mrb[0].mxu0
      %v650 = vadd.f32 %v290, %v649
      %v651 = vpop.f32.mrb[0].mxu0
      %v652 = vadd.f32 %v286, %v651
      %v653 = vpop.f32.mrb[0].mxu0
      %v654 = vadd.f32 %v290, %v653
      %655 = vmatprep.mubr.bf16.mxu0 0
      %656 = vmatmul.mubr.bf16.gmra.mrb[0].mxu0 %v232
      %v657 = vpop.f32.mrb[0].mxu0
      %v658 = vadd.f32 %v286, %v657
      %v659 = vpop.f32.mrb[0].mxu0
      %v660 = vadd.f32 %v290, %v659
      %v661 = vpop.f32.mrb[0].mxu0
      %v662 = vadd.f32 %v286, %v661
      %v663 = vpop.f32.mrb[0].mxu0
      %v664 = vadd.f32 %v290, %v663
      %665 = vdwg.mxu0
      %666 = vmatprep.subr.bf16.mxu0 %v460
      %667 = vmatpush1.bf16.msra.mxu0 %v459
      %668 = vmatprep.subr.bf16.mxu0 %v466
      %669 = vmatpush1.bf16.msra.mxu0 %v465
      %670 = vmatprep.subr.bf16.mxu0 %v472
      %671 = vmatpush1.bf16.msra.mxu0 %v471
      %672 = vmatprep.subr.bf16.mxu0 %v478
      %673 = vmatpush1.bf16.msra.mxu0 %v477
      %674 = vmatprep.subr.bf16.mxu0 %v484
      %675 = vmatpush1.bf16.msra.mxu0 %v483
      %676 = vmatprep.subr.bf16.mxu0 %v490
      %677 = vmatpush1.bf16.msra.mxu0 %v489
      %678 = vmatprep.subr.bf16.mxu0 %v496
      %679 = vmatpush1.bf16.msra.mxu0 %v495
      %680 = vmatprep.subr.bf16.mxu0 %v502
      %681 = vmatpush1.bf16.msra.mxu0 %v501
      %682 = vmatprep.subr.bf16.mxu0 0
      %683 = vmatpush1.bf16.msra.mxu0 0
      %684 = vmatprep.subr.bf16.mxu0 0
      %685 = vmatpush1.bf16.msra.mxu0 0
      %686 = vmatprep.subr.bf16.mxu0 0
      %687 = vmatpush1.bf16.msra.mxu0 0
      %688 = vmatprep.subr.bf16.mxu0 0
      %689 = vmatpush1.bf16.msra.mxu0 0
      %690 = vmatprep.subr.bf16.mxu0 0
      %691 = vmatpush1.bf16.msra.mxu0 0
      %692 = vmatprep.subr.bf16.mxu0 0
      %693 = vmatpush1.bf16.msra.mxu0 0
      %694 = vmatprep.subr.bf16.mxu0 0
      %695 = vmatpush1.bf16.msra.mxu0 0
      %696 = vmatprep.subr.bf16.mxu0 0
      %697 = vmatpush1.bf16.msra.mxu0 0
      %698 = vmatprep.mubr.bf16.mxu0 0
      %699 = vmatmul.mubr.bf16.gmra.mrb[0].mxu0 %v225
      %v700 = vpop.f32.mrb[0].mxu0
      %v701 = vadd.f32 %v294, %v700
      %v702 = vpop.f32.mrb[0].mxu0
      %v703 = vadd.f32 %v298, %v702
      %v704 = vpop.f32.mrb[0].mxu0
      %v705 = vadd.f32 %v294, %v704
      %v706 = vpop.f32.mrb[0].mxu0
      %v707 = vadd.f32 %v298, %v706
      %708 = vmatprep.mubr.bf16.mxu0 0
      %709 = vmatmul.mubr.bf16.gmra.mrb[0].mxu0 %v226
      %v710 = vpop.f32.mrb[0].mxu0
      %v711 = vadd.f32 %v294, %v710
      %v712 = vpop.f32.mrb[0].mxu0
      %v713 = vadd.f32 %v298, %v712
      %v714 = vpop.f32.mrb[0].mxu0
      %v715 = vadd.f32 %v294, %v714
      %v716 = vpop.f32.mrb[0].mxu0
      %v717 = vadd.f32 %v298, %v716
      %718 = vmatprep.mubr.bf16.mxu0 0
      %719 = vmatmul.mubr.bf16.gmra.mrb[0].mxu0 %v227
      %v720 = vpop.f32.mrb[0].mxu0
      %v721 = vadd.f32 %v294, %v720
      %v722 = vpop.f32.mrb[0].mxu0
      %v723 = vadd.f32 %v298, %v722
      %v724 = vpop.f32.mrb[0].mxu0
      %v725 = vadd.f32 %v294, %v724
      %v726 = vpop.f32.mrb[0].mxu0
      %v727 = vadd.f32 %v298, %v726
      %728 = vmatprep.mubr.bf16.mxu0 0
      %729 = vmatmul.mubr.bf16.gmra.mrb[0].mxu0 %v228
      %v730 = vpop.f32.mrb[0].mxu0
      %v731 = vadd.f32 %v294, %v730
      %v732 = vpop.f32.mrb[0].mxu0
      %v733 = vadd.f32 %v298, %v732
      %v734 = vpop.f32.mrb[0].mxu0
      %v735 = vadd.f32 %v294, %v734
      %v736 = vpop.f32.mrb[0].mxu0
      %v737 = vadd.f32 %v298, %v736
      %738 = vmatprep.mubr.bf16.mxu0 0
      %739 = vmatmul.mubr.bf16.gmra.mrb[0].mxu0 %v229
      %v740 = vpop.f32.mrb[0].mxu0
      %v741 = vadd.f32 %v294, %v740
      %v742 = vpop.f32.mrb[0].mxu0
      %v743 = vadd.f32 %v298, %v742
      %v744 = vpop.f32.mrb[0].mxu0
      %v745 = vadd.f32 %v294, %v744
      %v746 = vpop.f32.mrb[0].mxu0
      %v747 = vadd.f32 %v298, %v746
      %748 = vmatprep.mubr.bf16.mxu0 0
      %749 = vmatmul.mubr.bf16.gmra.mrb[0].mxu0 %v230
      %v750 = vpop.f32.mrb[0].mxu0
      %v751 = vadd.f32 %v294, %v750
      %v752 = vpop.f32.mrb[0].mxu0
      %v753 = vadd.f32 %v298, %v752
      %v754 = vpop.f32.mrb[0].mxu0
      %v755 = vadd.f32 %v294, %v754
      %v756 = vpop.f32.mrb[0].mxu0
      %v757 = vadd.f32 %v298, %v756
      %758 = vmatprep.mubr.bf16.mxu0 0
      %759 = vmatmul.mubr.bf16.gmra.mrb[0].mxu0 %v231
      %v760 = vpop.f32.mrb[0].mxu0
      %v761 = vadd.f32 %v294, %v760
      %v762 = vpop.f32.mrb[0].mxu0
      %v763 = vadd.f32 %v298, %v762
      %v764 = vpop.f32.mrb[0].mxu0
      %v765 = vadd.f32 %v294, %v764
      %v766 = vpop.f32.mrb[0].mxu0
      %v767 = vadd.f32 %v298, %v766
      %768 = vmatprep.mubr.bf16.mxu0 0
      %769 = vmatmul.mubr.bf16.gmra.mrb[0].mxu0 %v232
      %v770 = vpop.f32.mrb[0].mxu0
      %v771 = vadd.f32 %v294, %v770
      %v772 = vpop.f32.mrb[0].mxu0
      %v773 = vadd.f32 %v298, %v772
      %v774 = vpop.f32.mrb[0].mxu0
      %v775 = vadd.f32 %v294, %v774
      %v776 = vpop.f32.mrb[0].mxu0
      %v777 = vadd.f32 %v298, %v776
      %778 = vdwg.mxu0
      %779 = vmatprep.subr.bf16.mxu0 %v462
      %780 = vmatpush1.bf16.msra.mxu0 %v461
      %781 = vmatprep.subr.bf16.mxu0 %v468
      %782 = vmatpush1.bf16.msra.mxu0 %v467
      %783 = vmatprep.subr.bf16.mxu0 %v474
      %784 = vmatpush1.bf16.msra.mxu0 %v473
      %785 = vmatprep.subr.bf16.mxu0 %v480
      %786 = vmatpush1.bf16.msra.mxu0 %v479
      %787 = vmatprep.subr.bf16.mxu0 %v486
      %788 = vmatpush1.bf16.msra.mxu0 %v485
      %789 = vmatprep.subr.bf16.mxu0 %v492
      %790 = vmatpush1.bf16.msra.mxu0 %v491
      %791 = vmatprep.subr.bf16.mxu0 %v498
      %792 = vmatpush1.bf16.msra.mxu0 %v497
      %793 = vmatprep.subr.bf16.mxu0 %v504
      %794 = vmatpush1.bf16.msra.mxu0 %v503
      %795 = vmatprep.subr.bf16.mxu0 0
      %796 = vmatpush1.bf16.msra.mxu0 0
      %797 = vmatprep.subr.bf16.mxu0 0
      %798 = vmatpush1.bf16.msra.mxu0 0
      %799 = vmatprep.subr.bf16.mxu0 0
      %800 = vmatpush1.bf16.msra.mxu0 0
      %801 = vmatprep.subr.bf16.mxu0 0
      %802 = vmatpush1.bf16.msra.mxu0 0
      %803 = vmatprep.subr.bf16.mxu0 0
      %804 = vmatpush1.bf16.msra.mxu0 0
      %805 = vmatprep.subr.bf16.mxu0 0
      %806 = vmatpush1.bf16.msra.mxu0 0
      %807 = vmatprep.subr.bf16.mxu0 0
      %808 = vmatpush1.bf16.msra.mxu0 0
      %809 = vmatprep.subr.bf16.mxu0 0
      %810 = vmatpush1.bf16.msra.mxu0 0
      %811 = vmatprep.mubr.bf16.mxu0 0
      %812 = vmatmul.mubr.bf16.gmra.mrb[0].mxu0 %v225
      %v813 = vpop.f32.mrb[0].mxu0
      %v814 = vadd.f32 %v302, %v813
      %v815 = vpop.f32.mrb[0].mxu0
      %v816 = vadd.f32 %v306, %v815
      %v817 = vpop.f32.mrb[0].mxu0
      %v818 = vadd.f32 %v302, %v817
      %v819 = vpop.f32.mrb[0].mxu0
      %v820 = vadd.f32 %v306, %v819
      %821 = vmatprep.mubr.bf16.mxu0 0
      %822 = vmatmul.mubr.bf16.gmra.mrb[0].mxu0 %v226
      %v823 = vpop.f32.mrb[0].mxu0
      %v824 = vadd.f32 %v302, %v823
      %v825 = vpop.f32.mrb[0].mxu0
      %v826 = vadd.f32 %v306, %v825
      %v827 = vpop.f32.mrb[0].mxu0
      %v828 = vadd.f32 %v302, %v827
      %v829 = vpop.f32.mrb[0].mxu0
      %v830 = vadd.f32 %v306, %v829
      %831 = vmatprep.mubr.bf16.mxu0 0
      %832 = vmatmul.mubr.bf16.gmra.mrb[0].mxu0 %v227
      %v833 = vpop.f32.mrb[0].mxu0
      %v834 = vadd.f32 %v302, %v833
      %v835 = vpop.f32.mrb[0].mxu0
      %v836 = vadd.f32 %v306, %v835
      %v837 = vpop.f32.mrb[0].mxu0
      %v838 = vadd.f32 %v302, %v837
      %v839 = vpop.f32.mrb[0].mxu0
      %v840 = vadd.f32 %v306, %v839
      %841 = vmatprep.mubr.bf16.mxu0 0
      %842 = vmatmul.mubr.bf16.gmra.mrb[0].mxu0 %v228
      %v843 = vpop.f32.mrb[0].mxu0
      %v844 = vadd.f32 %v302, %v843
      %v845 = vpop.f32.mrb[0].mxu0
      %v846 = vadd.f32 %v306, %v845
      %v847 = vpop.f32.mrb[0].mxu0
      %v848 = vadd.f32 %v302, %v847
      %v849 = vpop.f32.mrb[0].mxu0
      %v850 = vadd.f32 %v306, %v849
      %851 = vmatprep.mubr.bf16.mxu0 0
      %852 = vmatmul.mubr.bf16.gmra.mrb[0].mxu0 %v229
      %v853 = vpop.f32.mrb[0].mxu0
      %v854 = vadd.f32 %v302, %v853
      %v855 = vpop.f32.mrb[0].mxu0
      %v856 = vadd.f32 %v306, %v855
      %v857 = vpop.f32.mrb[0].mxu0
      %v858 = vadd.f32 %v302, %v857
      %v859 = vpop.f32.mrb[0].mxu0
      %v860 = vadd.f32 %v306, %v859
      %861 = vmatprep.mubr.bf16.mxu0 0
      %862 = vmatmul.mubr.bf16.gmra.mrb[0].mxu0 %v230
      %v863 = vpop.f32.mrb[0].mxu0
      %v864 = vadd.f32 %v302, %v863
      %v865 = vpop.f32.mrb[0].mxu0
      %v866 = vadd.f32 %v306, %v865
      %v867 = vpop.f32.mrb[0].mxu0
      %v868 = vadd.f32 %v302, %v867
      %v869 = vpop.f32.mrb[0].mxu0
      %v870 = vadd.f32 %v306, %v869
      %871 = vmatprep.mubr.bf16.mxu0 0
      %872 = vmatmul.mubr.bf16.gmra.mrb[0].mxu0 %v231
      %v873 = vpop.f32.mrb[0].mxu0
      %v874 = vadd.f32 %v302, %v873
      %v875 = vpop.f32.mrb[0].mxu0
      %v876 = vadd.f32 %v306, %v875
      %v877 = vpop.f32.mrb[0].mxu0
      %v878 = vadd.f32 %v302, %v877
      %v879 = vpop.f32.mrb[0].mxu0
      %v880 = vadd.f32 %v306, %v879
      %881 = vmatprep.mubr.bf16.mxu0 0
      %882 = vmatmul.mubr.bf16.gmra.mrb[0].mxu0 %v232
      %v883 = vpop.f32.mrb[0].mxu0
      %v884 = vadd.f32 %v302, %v883
      %v885 = vpop.f32.mrb[0].mxu0
      %v886 = vadd.f32 %v306, %v885
      %v887 = vpop.f32.mrb[0].mxu0
      %v888 = vadd.f32 %v302, %v887
      %v889 = vpop.f32.mrb[0].mxu0
      %v890 = vadd.f32 %v306, %v889
      %891 = vdwg.mxu0
      %v892 = vadd.f32 %v588, %v703
      %v893 = vadd.f32 %v592, %v707
      %v894 = vadd.f32 %v598, %v713
      %v895 = vadd.f32 %v602, %v717
      %v896 = vadd.f32 %v608, %v723
      %v897 = vadd.f32 %v612, %v727
      %v898 = vadd.f32 %v618, %v733
      %v899 = vadd.f32 %v622, %v737
      %v900 = vadd.f32 %v628, %v743
      %v901 = vadd.f32 %v632, %v747
      %v902 = vadd.f32 %v638, %v753
      %v903 = vadd.f32 %v642, %v757
      %v904 = vadd.f32 %v648, %v763
      %v905 = vadd.f32 %v652, %v767
      %v906 = vadd.f32 %v658, %v773
      %v907 = vadd.f32 %v662, %v777
      %v908 = vxor.u32 %v892, 2147483648
      %v909 = vxor.u32 %v893, 2147483648
      %v910 = vxor.u32 %v894, 2147483648
      %v911 = vxor.u32 %v895, 2147483648
      %v912 = vxor.u32 %v896, 2147483648
      %v913 = vxor.u32 %v897, 2147483648
      %v914 = vxor.u32 %v898, 2147483648
      %v915 = vxor.u32 %v899, 2147483648
      %v916 = vxor.u32 %v900, 2147483648
      %v917 = vxor.u32 %v901, 2147483648
      %v918 = vxor.u32 %v902, 2147483648
      %v919 = vxor.u32 %v903, 2147483648
      %v920 = vxor.u32 %v904, 2147483648
      %v921 = vxor.u32 %v905, 2147483648
      %v922 = vxor.u32 %v906, 2147483648
      %v923 = vxor.u32 %v907, 2147483648
      %v924 = vmul.f32 %v908, 1.442695
      %v925 = vpow.pop %v924
      %v926 = vmul.f32 %v909, 1.442695
      %v927 = vpow.pop %v926
      %v928 = vmul.f32 %v910, 1.442695
      %v929 = vpow.pop %v928
      %v930 = vmul.f32 %v911, 1.442695
      %v931 = vpow.pop %v930
      %v932 = vmul.f32 %v912, 1.442695
      %v933 = vpow.pop %v932
      %v934 = vmul.f32 %v913, 1.442695
      %v935 = vpow.pop %v934
      %v936 = vmul.f32 %v914, 1.442695
      %v937 = vpow.pop %v936
      %v938 = vmul.f32 %v915, 1.442695
      %v939 = vpow.pop %v938
      %v940 = vmul.f32 %v916, 1.442695
      %v941 = vpow.pop %v940
      %v942 = vmul.f32 %v917, 1.442695
      %v943 = vpow.pop %v942
      %v944 = vmul.f32 %v918, 1.442695
      %v945 = vpow.pop %v944
      %v946 = vmul.f32 %v919, 1.442695
      %v947 = vpow.pop %v946
      %v948 = vmul.f32 %v920, 1.442695
      %v949 = vpow.pop %v948
      %v950 = vmul.f32 %v921, 1.442695
      %v951 = vpow.pop %v950
      %v952 = vmul.f32 %v922, 1.442695
      %v953 = vpow.pop %v952
      %v954 = vmul.f32 %v923, 1.442695
      %v955 = vpow.pop %v954
      %v956 = vadd.f32 %v925, 1.0
      %v957 = vadd.f32 %v927, 1.0
      %v958 = vadd.f32 %v929, 1.0
      %v959 = vadd.f32 %v931, 1.0
      %v960 = vadd.f32 %v933, 1.0
      %v961 = vadd.f32 %v935, 1.0
      %v962 = vadd.f32 %v937, 1.0
      %v963 = vadd.f32 %v939, 1.0
      %v964 = vadd.f32 %v941, 1.0
      %v965 = vadd.f32 %v943, 1.0
      %v966 = vadd.f32 %v945, 1.0
      %v967 = vadd.f32 %v947, 1.0
      %v968 = vadd.f32 %v949, 1.0
      %v969 = vadd.f32 %v951, 1.0
      %v970 = vadd.f32 %v953, 1.0
      %v971 = vadd.f32 %v955, 1.0
      %v972 = vrcp.pop %v956
      %v973 = vmul.f32 1.0, %v972
      %v974 = vrcp.pop %v957
      %v975 = vmul.f32 1.0, %v974
      %v976 = vrcp.pop %v958
      %v977 = vmul.f32 1.0, %v976
      %v978 = vrcp.pop %v959
      %v979 = vmul.f32 1.0, %v978
      %v980 = vrcp.pop %v960
      %v981 = vmul.f32 1.0, %v980
      %v982 = vrcp.pop %v961
      %v983 = vmul.f32 1.0, %v982
      %v984 = vrcp.pop %v962
      %v985 = vmul.f32 1.0, %v984
      %v986 = vrcp.pop %v963
      %v987 = vmul.f32 1.0, %v986
      %v988 = vrcp.pop %v964
      %v989 = vmul.f32 1.0, %v988
      %v990 = vrcp.pop %v965
      %v991 = vmul.f32 1.0, %v990
      %v992 = vrcp.pop %v966
      %v993 = vmul.f32 1.0, %v992
      %v994 = vrcp.pop %v967
      %v995 = vmul.f32 1.0, %v994
      %v996 = vrcp.pop %v968
      %v997 = vmul.f32 1.0, %v996
      %v998 = vrcp.pop %v969
      %v999 = vmul.f32 1.0, %v998
      %v1000 = vrcp.pop %v970
      %v1001 = vmul.f32 1.0, %v1000
      %v1002 = vrcp.pop %v971
      %v1003 = vmul.f32 1.0, %v1002
      %v1004 = vmul.f32 %v973, %v816
      %v1005 = vmul.f32 %v975, %v820
      %v1006 = vmul.f32 %v977, %v826
      %v1007 = vmul.f32 %v979, %v830
      %v1008 = vmul.f32 %v981, %v836
      %v1009 = vmul.f32 %v983, %v840
      %v1010 = vmul.f32 %v985, %v846
      %v1011 = vmul.f32 %v987, %v850
      %v1012 = vmul.f32 %v989, %v856
      %v1013 = vmul.f32 %v991, %v860
      %v1014 = vmul.f32 %v993, %v866
      %v1015 = vmul.f32 %v995, %v870
      %v1016 = vmul.f32 %v997, %v876
      %v1017 = vmul.f32 %v999, %v880
      %v1018 = vmul.f32 %v1001, %v886
      %v1019 = vmul.f32 %v1003, %v890
      %v1020 = vadd.f32 %v701, %v1004
      %v1021 = vadd.f32 %v705, %v1005
      %v1022 = vadd.f32 %v711, %v1006
      %v1023 = vadd.f32 %v715, %v1007
      %v1024 = vadd.f32 %v721, %v1008
      %v1025 = vadd.f32 %v725, %v1009
      %v1026 = vadd.f32 %v731, %v1010
      %v1027 = vadd.f32 %v735, %v1011
      %v1028 = vadd.f32 %v741, %v1012
      %v1029 = vadd.f32 %v745, %v1013
      %v1030 = vadd.f32 %v751, %v1014
      %v1031 = vadd.f32 %v755, %v1015
      %v1032 = vadd.f32 %v761, %v1016
      %v1033 = vadd.f32 %v765, %v1017
      %v1034 = vadd.f32 %v771, %v1018
      %v1035 = vadd.f32 %v775, %v1019
      %v1036 = vtanh.pop %v1020
      %v1037 = vtanh.pop %v1021
      %v1038 = vtanh.pop %v1022
      %v1039 = vtanh.pop %v1023
      %v1040 = vtanh.pop %v1024
      %v1041 = vtanh.pop %v1025
      %v1042 = vtanh.pop %v1026
      %v1043 = vtanh.pop %v1027
      %v1044 = vtanh.pop %v1028
      %v1045 = vtanh.pop %v1029
      %v1046 = vtanh.pop %v1030
      %v1047 = vtanh.pop %v1031
      %v1048 = vtanh.pop %v1032
      %v1049 = vtanh.pop %v1033
      %v1050 = vtanh.pop %v1034
      %v1051 = vtanh.pop %v1035
      %v1052 = vadd.f32 %v590, %v814
      %v1053 = vadd.f32 %v594, %v818
      %v1054 = vadd.f32 %v600, %v824
      %v1055 = vadd.f32 %v604, %v828
      %v1056 = vadd.f32 %v610, %v834
      %v1057 = vadd.f32 %v614, %v838
      %v1058 = vadd.f32 %v620, %v844
      %v1059 = vadd.f32 %v624, %v848
      %v1060 = vadd.f32 %v630, %v854
      %v1061 = vadd.f32 %v634, %v858
      %v1062 = vadd.f32 %v640, %v864
      %v1063 = vadd.f32 %v644, %v868
      %v1064 = vadd.f32 %v650, %v874
      %v1065 = vadd.f32 %v654, %v878
      %v1066 = vadd.f32 %v660, %v884
      %v1067 = vadd.f32 %v664, %v888
      %v1068 = vxor.u32 %v1052, 2147483648
      %v1069 = vxor.u32 %v1053, 2147483648
      %v1070 = vxor.u32 %v1054, 2147483648
      %v1071 = vxor.u32 %v1055, 2147483648
      %v1072 = vxor.u32 %v1056, 2147483648
      %v1073 = vxor.u32 %v1057, 2147483648
      %v1074 = vxor.u32 %v1058, 2147483648
      %v1075 = vxor.u32 %v1059, 2147483648
      %v1076 = vxor.u32 %v1060, 2147483648
      %v1077 = vxor.u32 %v1061, 2147483648
      %v1078 = vxor.u32 %v1062, 2147483648
      %v1079 = vxor.u32 %v1063, 2147483648
      %v1080 = vxor.u32 %v1064, 2147483648
      %v1081 = vxor.u32 %v1065, 2147483648
      %v1082 = vxor.u32 %v1066, 2147483648
      %v1083 = vxor.u32 %v1067, 2147483648
      %v1084 = vmul.f32 %v1068, 1.442695
      %v1085 = vpow.pop %v1084
      %v1086 = vmul.f32 %v1069, 1.442695
      %v1087 = vpow.pop %v1086
      %v1088 = vmul.f32 %v1070, 1.442695
      %v1089 = vpow.pop %v1088
      %v1090 = vmul.f32 %v1071, 1.442695
      %v1091 = vpow.pop %v1090
      %v1092 = vmul.f32 %v1072, 1.442695
      %v1093 = vpow.pop %v1092
      %v1094 = vmul.f32 %v1073, 1.442695
      %v1095 = vpow.pop %v1094
      %v1096 = vmul.f32 %v1074, 1.442695
      %v1097 = vpow.pop %v1096
      %v1098 = vmul.f32 %v1075, 1.442695
      %v1099 = vpow.pop %v1098
      %v1100 = vmul.f32 %v1076, 1.442695
      %v1101 = vpow.pop %v1100
      %v1102 = vmul.f32 %v1077, 1.442695
      %v1103 = vpow.pop %v1102
      %v1104 = vmul.f32 %v1078, 1.442695
      %v1105 = vpow.pop %v1104
      %v1106 = vmul.f32 %v1079, 1.442695
      %v1107 = vpow.pop %v1106
      %v1108 = vmul.f32 %v1080, 1.442695
      %v1109 = vpow.pop %v1108
      %v1110 = vmul.f32 %v1081, 1.442695
      %v1111 = vpow.pop %v1110
      %v1112 = vmul.f32 %v1082, 1.442695
      %v1113 = vpow.pop %v1112
      %v1114 = vmul.f32 %v1083, 1.442695
      %v1115 = vpow.pop %v1114
      %v1116 = vadd.f32 %v1085, 1.0
      %v1117 = vadd.f32 %v1087, 1.0
      %v1118 = vadd.f32 %v1089, 1.0
      %v1119 = vadd.f32 %v1091, 1.0
      %v1120 = vadd.f32 %v1093, 1.0
      %v1121 = vadd.f32 %v1095, 1.0
      %v1122 = vadd.f32 %v1097, 1.0
      %v1123 = vadd.f32 %v1099, 1.0
      %v1124 = vadd.f32 %v1101, 1.0
      %v1125 = vadd.f32 %v1103, 1.0
      %v1126 = vadd.f32 %v1105, 1.0
      %v1127 = vadd.f32 %v1107, 1.0
      %v1128 = vadd.f32 %v1109, 1.0
      %v1129 = vadd.f32 %v1111, 1.0
      %v1130 = vadd.f32 %v1113, 1.0
      %v1131 = vadd.f32 %v1115, 1.0
      %v1132 = vrcp.pop %v1116
      %v1133 = vmul.f32 1.0, %v1132
      %v1134 = vrcp.pop %v1117
      %v1135 = vmul.f32 1.0, %v1134
      %v1136 = vrcp.pop %v1118
      %v1137 = vmul.f32 1.0, %v1136
      %v1138 = vrcp.pop %v1119
      %v1139 = vmul.f32 1.0, %v1138
      %v1140 = vrcp.pop %v1120
      %v1141 = vmul.f32 1.0, %v1140
      %v1142 = vrcp.pop %v1121
      %v1143 = vmul.f32 1.0, %v1142
      %v1144 = vrcp.pop %v1122
      %v1145 = vmul.f32 1.0, %v1144
      %v1146 = vrcp.pop %v1123
      %v1147 = vmul.f32 1.0, %v1146
      %v1148 = vrcp.pop %v1124
      %v1149 = vmul.f32 1.0, %v1148
      %v1150 = vrcp.pop %v1125
      %v1151 = vmul.f32 1.0, %v1150
      %v1152 = vrcp.pop %v1126
      %v1153 = vmul.f32 1.0, %v1152
      %v1154 = vrcp.pop %v1127
      %v1155 = vmul.f32 1.0, %v1154
      %v1156 = vrcp.pop %v1128
      %v1157 = vmul.f32 1.0, %v1156
      %v1158 = vrcp.pop %v1129
      %v1159 = vmul.f32 1.0, %v1158
      %v1160 = vrcp.pop %v1130
      %v1161 = vmul.f32 1.0, %v1160
      %v1162 = vrcp.pop %v1131
      %v1163 = vmul.f32 1.0, %v1162
      %v1164 = vsub.f32 1.0, %v1133
      %v1165 = vsub.f32 1.0, %v1135
      %v1166 = vsub.f32 1.0, %v1137
      %v1167 = vsub.f32 1.0, %v1139
      %v1168 = vsub.f32 1.0, %v1141
      %v1169 = vsub.f32 1.0, %v1143
      %v1170 = vsub.f32 1.0, %v1145
      %v1171 = vsub.f32 1.0, %v1147
      %v1172 = vsub.f32 1.0, %v1149
      %v1173 = vsub.f32 1.0, %v1151
      %v1174 = vsub.f32 1.0, %v1153
      %v1175 = vsub.f32 1.0, %v1155
      %v1176 = vsub.f32 1.0, %v1157
      %v1177 = vsub.f32 1.0, %v1159
      %v1178 = vsub.f32 1.0, %v1161
      %v1179 = vsub.f32 1.0, %v1163
      %v1180 = vsub.f32 %v1036, %v209
      %v1181 = vsub.f32 %v1037, %v210
      %v1182 = vsub.f32 %v1038, %v211
      %v1183 = vsub.f32 %v1039, %v212
      %v1184 = vsub.f32 %v1040, %v213
      %v1185 = vsub.f32 %v1041, %v214
      %v1186 = vsub.f32 %v1042, %v215
      %v1187 = vsub.f32 %v1043, %v216
      %v1188 = vsub.f32 %v1044, %v217
      %v1189 = vsub.f32 %v1045, %v218
      %v1190 = vsub.f32 %v1046, %v219
      %v1191 = vsub.f32 %v1047, %v220
      %v1192 = vsub.f32 %v1048, %v221
      %v1193 = vsub.f32 %v1049, %v222
      %v1194 = vsub.f32 %v1050, %v223
      %v1195 = vsub.f32 %v1051, %v224
      %v1196 = vmul.f32 %v1164, %v1180
      %v1197 = vmul.f32 %v1165, %v1181
      %v1198 = vmul.f32 %v1166, %v1182
      %v1199 = vmul.f32 %v1167, %v1183
      %v1200 = vmul.f32 %v1168, %v1184
      %v1201 = vmul.f32 %v1169, %v1185
      %v1202 = vmul.f32 %v1170, %v1186
      %v1203 = vmul.f32 %v1171, %v1187
      %v1204 = vmul.f32 %v1172, %v1188
      %v1205 = vmul.f32 %v1173, %v1189
      %v1206 = vmul.f32 %v1174, %v1190
      %v1207 = vmul.f32 %v1175, %v1191
      %v1208 = vmul.f32 %v1176, %v1192
      %v1209 = vmul.f32 %v1177, %v1193
      %v1210 = vmul.f32 %v1178, %v1194
      %v1211 = vmul.f32 %v1179, %v1195
      %v1212 = vadd.f32 %v209, %v1196
      %v1213 = vadd.f32 %v210, %v1197
      %v1214 = vadd.f32 %v211, %v1198
      %v1215 = vadd.f32 %v212, %v1199
      %v1216 = vadd.f32 %v213, %v1200
      %v1217 = vadd.f32 %v214, %v1201
      %v1218 = vadd.f32 %v215, %v1202
      %v1219 = vadd.f32 %v216, %v1203
      %v1220 = vadd.f32 %v217, %v1204
      %v1221 = vadd.f32 %v218, %v1205
      %v1222 = vadd.f32 %v219, %v1206
      %v1223 = vadd.f32 %v220, %v1207
      %v1224 = vadd.f32 %v221, %v1208
      %v1225 = vadd.f32 %v222, %v1209
      %v1226 = vadd.f32 %v223, %v1210
      %v1227 = vadd.f32 %v224, %v1211
      %1228 = vst [vmem:[%s207] sm:$0xff] %v1212
      %1229 = vst [vmem:[%s207 + $0x8] sm:$0xff] %v1213
      %1230 = vst [vmem:[%s207 + $0x10] sm:$0xff] %v1214
      %1231 = vst [vmem:[%s207 + $0x18] sm:$0xff] %v1215
      %1232 = vst [vmem:[%s207 + $0x20] sm:$0xff] %v1216
      %1233 = vst [vmem:[%s207 + $0x28] sm:$0xff] %v1217
      %1234 = vst [vmem:[%s207 + $0x30] sm:$0xff] %v1218
      %1235 = vst [vmem:[%s207 + $0x38] sm:$0xff] %v1219
      %1236 = vst [vmem:[%s207 + $0x40] sm:$0xff] %v1220
      %1237 = vst [vmem:[%s207 + $0x48] sm:$0xff] %v1221
      %1238 = vst [vmem:[%s207 + $0x50] sm:$0xff] %v1222
      %1239 = vst [vmem:[%s207 + $0x58] sm:$0xff] %v1223
      %1240 = vst [vmem:[%s207 + $0x60] sm:$0xff] %v1224
      %1241 = vst [vmem:[%s207 + $0x68] sm:$0xff] %v1225
      %1242 = vst [vmem:[%s207 + $0x70] sm:$0xff] %v1226
      %1243 = vst [vmem:[%s207 + $0x78] sm:$0xff] %v1227
      %p1244 = scmp.lt.s32.totalorder %s14, 1
      %s1245 = scalar_select %p1244, %s14, 1
      %s1246 = smul.addr %s1245, 16
      %s1247 = smul.addr %s1246, 8
      %s1248 = scalar_lea.vmem %s3, %s1247
      // Predicated region
      $region33: #{recurrent_gcn_forward.3} parent=31 // pred_check
        %p1249 = pneg %p110
      $region34: #{recurrent_gcn_forward.3} parent=31 // pred_check_branch
        %1251 = sbr.rel (%p1249) target = $region36
      $region35: #{recurrent_gcn_forward.3} parent=31 // pred_region
        _
      $region36: #{recurrent_gcn_forward.3} parent=31 // pred_fallthru
        _
    $region32: #{recurrent_gcn_forward.3} parent=5 // pred_fallthru
      _
    %p1252 = scmp.le.s32.totalorder 2, %s9
    // Predicated region
    $region37: #{recurrent_gcn_forward.3} parent=5 // pred_check
      %p1253 = pneg %p1252
    $region38: #{recurrent_gcn_forward.3} parent=5 // pred_check_branch
      %1255 = sbr.rel (%p1253) target = $region40
    $region39: #{recurrent_gcn_forward.3} parent=5 // pred_region
      %s1256 = ssub.s32 %s9, 2
      // Predicated region
      $region41: #{recurrent_gcn_forward.3} parent=39 // pred_check
        %p1257 = pneg %p116
      $region42: #{recurrent_gcn_forward.3} parent=39 // pred_check_branch
        %1259 = sbr.rel (%p1257) target = $region44
      $region43: #{recurrent_gcn_forward.3} parent=39 // pred_region
        %p1260 = scmp.lt.s32.totalorder %s15, 1
        %s1261 = scalar_select %p1260, %s15, 1
        %s1262 = smul.addr %s1261, 16
        %s1263 = smul.addr %s1262, 8
        %s1264 = scalar_lea.vmem %s3, %s1263
      $region44: #{recurrent_gcn_forward.3} parent=39 // pred_fallthru
        _
    $region40: #{recurrent_gcn_forward.3} parent=5 // pred_fallthru
      _
  $region6: #{recurrent_gcn_forward.3} parent=0 // loop_footer
    %s13 = sadd.s32 1, %s9
  $region7: #{recurrent_gcn_forward.3} parent=0 // loop_footer_branch
    %8 = sbr.rel target = $region3
  $region8: #{recurrent_gcn_forward.3} parent=0 // loop_exit
    _

</llo_original>
